<compile_context>
chip_gen: v6e
topology: v6e:2x2x1
jax: 0.10.0
libtpu: 0.0.40
codegen_flags: <defaults>
</compile_context>

<pallas_src>
import functools

import jax
import jax.numpy as jnp
from jax.experimental import pallas as pl
from jax.experimental.pallas import tpu as pltpu


INPUT_SIZE = 23
HIDDEN_SIZE = 23
SEQ_LEN = 8

LANE = 128
N_LANES = 5 * LANE            # 4 gate lane-blocks + 1 head lane-block
N_ROWS = 136                  # 128 weight-slab rows + 8 misc rows

# Row/lane layout of the single packed (136, 640) f32 parameter buffer.
_ROW_WHH = 0                  # rows [0,23)  : W_hh^T   (i/f/o columns pre-scaled x0.5)
_ROW_HEAD = 32                # rows [32,..) : head layers 2..4 (lane blocks 0..2)
_ROW_WIH = 64                 # rows [64,87) : W_ih^T   (i/f/o columns pre-scaled x0.5)
_ROW_B = 128                  # LSTM bias row (pre-scaled)
_ROW_HC0 = 129                # initial h/c state: ones in lanes [0,23)
_ROW_HB = 130                 # head bias row
_HEAD_COL = 32                # local lane offset where each head layer's output lands
_X_LANE = 64                  # lane offset where the 23 raw input features are placed

_GATE_SCALE = (0.5, 0.5, 1.0, 0.5)        # i, f, g, o  (sigmoid -> tanh rewrite)
# head layer -> (weight key, bias key, lane block, weight row offset)
_HEAD_LAYOUT = (("w1", "b1", 4, 0),       # layer1 input is h: real lanes [0,23)
                ("w2", "b2", 0, _ROW_HEAD),
                ("w3", "b3", 1, _ROW_HEAD),
                ("w4", "b4", 2, _ROW_HEAD))


def _seq_regressor_kernel(x_ref, p_ref, out_ref, *, seq_len):
    L = LANE

    # Loop-invariant gates RHS, loaded once (Mosaic streams matmul operands
    # from VMEM; hoisting the load lets it share one operand across all dots).
    # TODO(synk): drive the MXU explicitly (pltpu.matmul_push_rhs once +
    # matmul_acc_lhs per step) if a bundle dump shows the RHS re-pushed per step.
    w_gates = p_ref[0:128, 0:4 * L]                       # (128, 512)
    b_lstm = p_ref[_ROW_B:_ROW_B + 1, 0:4 * L]            # (1, 512), pre-scaled
    hc0 = p_ref[_ROW_HC0:_ROW_HC0 + 1, 0:L]               # (1, 128), ones in lanes [0,23)

    # Hoisted input projection + bias: one (S_pad,128)@(128,512) MXU matmul and
    # one broadcast add, both outside the serial recurrence.
    xwb = jnp.dot(x_ref[...], w_gates, preferred_element_type=jnp.float32) + b_lstm

    h = hc0
    c = hc0

    # Fully unrolled recurrence (seq_len is a small static constant).
    for t in range(seq_len):
        gates = xwb[t:t + 1, :] + jnp.dot(h, w_gates,
                                          preferred_element_type=jnp.float32)  # (1, 512)
        # sigmoid(z) = 0.5*tanh(z/2) + 0.5, with the /2 pre-folded into the
        # packed i/f/o weight columns -> a single EUP tanh over all 4 blocks.
        tg = jnp.tanh(gates)
        i_g = 0.5 * tg[:, 0 * L:1 * L] + 0.5
        f_g = 0.5 * tg[:, 1 * L:2 * L] + 0.5
        g_g = tg[:, 2 * L:3 * L]
        o_g = 0.5 * tg[:, 3 * L:4 * L] + 0.5
        c = f_g * c + i_g * g_g
        h = o_g * jnp.tanh(c)
        # Padded lanes: gates == 0 there, so i=f=o=0.5 and g=0; since c starts
        # at exactly 0 in padded lanes, c stays 0 and h = 0.5*tanh(0) = 0.

    # x = relu(out[:, -1, :][-1]) -> last hidden state, then the MLP head.
    # Each layer is one (1,128)@(128,128) matmul against its own lane block of
    # the shared slab; the weight rows of each layer match the lanes where its
    # input's real values live, so no lane shuffling is needed anywhere.
    v = jnp.maximum(h, 0.0)                                              # (1, 128)
    for _, _, blk, _ in _HEAD_LAYOUT:
        w_k = p_ref[0:128, blk * L:(blk + 1) * L]                        # (128, 128)
        b_k = p_ref[_ROW_HB:_ROW_HB + 1, blk * L:(blk + 1) * L]          # (1, 128)
        v = jnp.maximum(
            jnp.dot(v, w_k, preferred_element_type=jnp.float32) + b_k, 0.0)

    out_ref[...] = v                                  # (1, 128); result in lane _HEAD_COL


@jax.jit
def seq_regressor_forward(x, packed_params):
    """x: (seq_len, 23) float32. Returns shape (1,) float32 (same as PyTorch)."""
    seq_len, in_dim = x.shape
    s_pad = max(8, ((seq_len + 7) // 8) * 8)
    # Input features live at lanes [64, 64+23) so x@slab only touches W_ih rows.
    x_pad = jnp.zeros((s_pad, LANE), jnp.float32).at[
        :seq_len, _X_LANE:_X_LANE + in_dim].set(x)

    vmem = pl.BlockSpec(memory_space=pltpu.MemorySpace.VMEM)
    out = pl.pallas_call(
        functools.partial(_seq_regressor_kernel, seq_len=seq_len),
        out_shape=jax.ShapeDtypeStruct((1, LANE), jnp.float32),
        in_specs=[vmem, vmem],
        out_specs=vmem,
    )(x_pad, packed_params)
    return out[0, _HEAD_COL:_HEAD_COL + 1]


def init_params(key, hidden_size=HIDDEN_SIZE, input_size=INPUT_SIZE):
    """Deterministic synthetic parameters matching the module's shapes (unpadded)."""
    ks = jax.random.split(key, 12)
    k_lstm = 1.0 / jnp.sqrt(hidden_size)

    def u(k, shape, bound):
        return jax.random.uniform(k, shape, jnp.float32, -bound, bound)

    # PyTorch stores weight_ih_l0 (4H, I) / weight_hh_l0 (4H, H); we keep transposed.
    w_ih = u(ks[0], (4 * hidden_size, input_size), k_lstm)
    w_hh = u(ks[1], (4 * hidden_size, hidden_size), k_lstm)
    b_ih = u(ks[2], (4 * hidden_size,), k_lstm)
    b_hh = u(ks[3], (4 * hidden_size,), k_lstm)

    def linear(kw, kb, fan_in, fan_out):
        bound = 1.0 / jnp.sqrt(fan_in)
        w = u(kw, (fan_out, fan_in), bound)   # PyTorch nn.Linear weight layout
        b = u(kb, (fan_out,), bound)
        return w.T, b.reshape(1, fan_out)     # transposed for row-vector matmul

    w1, b1 = linear(ks[4], ks[5], hidden_size, 20)
    w2, b2 = linear(ks[6], ks[7], 20, 15)
    w3, b3 = linear(ks[8], ks[9], 15, 7)
    w4, b4 = linear(ks[10], ks[11], 7, 1)

    return {
        "w_ih_T": w_ih.T,                               # (I, 4H), gate order i,f,g,o
        "w_hh_T": w_hh.T,                               # (H, 4H)
        "b_lstm": (b_ih + b_hh).reshape(1, 4 * hidden_size),
        "w1": w1, "b1": b1,
        "w2": w2, "b2": b2,
        "w3": w3, "b3": b3,
        "w4": w4, "b4": b4,
    }


def pack_params(p):
    """Pack all parameters into one (136, 640) f32 buffer.

    All weights share one 128-row slab: W_hh at rows [0,23), W_ih at rows
    [64,87), head layers 2..4 at rows [32,..) of lane blocks 0..2, head layer 1
    at rows [0,23) of lane block 4.  The i/f/o gate columns (and bias) are
    pre-scaled by 0.5 for the tanh-form sigmoid used in the kernel.  All other
    entries are exactly zero (required: they multiply zero lanes of x/h/v).
    """
    H, I, L = HIDDEN_SIZE, INPUT_SIZE, LANE
    buf = jnp.zeros((N_ROWS, N_LANES), jnp.float32)

    for g in range(4):
        s = _GATE_SCALE[g]
        c0 = g * L
        buf = buf.at[_ROW_WHH:_ROW_WHH + H, c0:c0 + H].set(
            s * p["w_hh_T"][:, g * H:(g + 1) * H])
        buf = buf.at[_ROW_WIH:_ROW_WIH + I, c0:c0 + H].set(
            s * p["w_ih_T"][:, g * H:(g + 1) * H])
        buf = buf.at[_ROW_B, c0:c0 + H].set(s * p["b_lstm"][0, g * H:(g + 1) * H])

    # Initial hidden/cell state torch.ones(1,1,H); padded lanes stay zero.
    buf = buf.at[_ROW_HC0, 0:H].set(1.0)

    for nw, nb, blk, r0 in _HEAD_LAYOUT:
        w = p[nw]                                 # (fan_in, fan_out)
        fi, fo = w.shape
        c0 = blk * L + _HEAD_COL
        buf = buf.at[r0:r0 + fi, c0:c0 + fo].set(w)
        buf = buf.at[_ROW_HB, c0:c0 + fo].set(p[nb][0])

    assert buf.shape == (N_ROWS, N_LANES)
    return buf


def _reference_forward(x, p):
    """Pure-JAX reference of the PyTorch forward (stochastic=False)."""
    H = HIDDEN_SIZE
    h = jnp.ones((1, H), jnp.float32)
    c = jnp.ones((1, H), jnp.float32)
    for t in range(x.shape[0]):
        gates = x[t:t + 1] @ p["w_ih_T"] + h @ p["w_hh_T"] + p["b_lstm"]
        i_g = jax.nn.sigmoid(gates[:, 0 * H:1 * H])
        f_g = jax.nn.sigmoid(gates[:, 1 * H:2 * H])
        g_g = jnp.tanh(gates[:, 2 * H:3 * H])
        o_g = jax.nn.sigmoid(gates[:, 3 * H:4 * H])
        c = f_g * c + i_g * g_g
        h = o_g * jnp.tanh(c)
    v = jnp.maximum(h, 0.0)
    v = jnp.maximum(v @ p["w1"] + p["b1"], 0.0)
    v = jnp.maximum(v @ p["w2"] + p["b2"], 0.0)
    v = jnp.maximum(v @ p["w3"] + p["b3"], 0.0)
    v = jnp.maximum(v @ p["w4"] + p["b4"], 0.0)
    return v.reshape((1,))


# TODO(synk): stochastic=True branch (torch.load'ed gamma, torch.rand noise and the
# persistent `memory` state from eval()) has no checkpoint-free equivalent here;
# only the stochastic=False forward is implemented.

if __name__ == "__main__":
    key = jax.random.PRNGKey(0)
    k_params, k_x = jax.random.split(key)
    raw_params = init_params(k_params)
    packed = pack_params(raw_params)

    # x follows PyTorch nn.LSTM layout (seq, batch=1, input) with batch squeezed.
    x = jax.random.normal(k_x, (SEQ_LEN, INPUT_SIZE), dtype=jnp.float32)

    out = seq_regressor_forward(x, packed)
    jax.block_until_ready(out)

    ref = _reference_forward(x, raw_params)
    assert out.shape == (1,)
    assert jnp.allclose(out, ref, atol=1e-5, rtol=1e-4), (out, ref)
    print("KERNEL_OK")
</pallas_src>

<mosaic_0001>
module attributes {stable_mosaic.version = 11 : i64} {
  func.func @_seq_regressor_kernel(%arg0: memref<8x128xf32, #tpu.memory_space<vmem>>, %arg1: memref<136x640xf32, #tpu.memory_space<vmem>>, %arg2: memref<1x128xf32, #tpu.memory_space<vmem>>) attributes {dimension_semantics = [], scalar_prefetch = 0 : i64, scratch_operands = 0 : i64, tpu.core_type = #tpu.core_type<tc>} {
    %c0 = arith.constant 0 : index
    %c0_0 = arith.constant 0 : index
    %0 = vector.load %arg1[%c0, %c0_0] : memref<136x640xf32, #tpu.memory_space<vmem>>, vector<128x512xf32>
    %c128 = arith.constant 128 : index
    %c0_1 = arith.constant 0 : index
    %1 = vector.load %arg1[%c128, %c0_1] : memref<136x640xf32, #tpu.memory_space<vmem>>, vector<1x512xf32>
    %c129 = arith.constant 129 : index
    %c0_2 = arith.constant 0 : index
    %2 = vector.load %arg1[%c129, %c0_2] : memref<136x640xf32, #tpu.memory_space<vmem>>, vector<1x128xf32>
    %c0_3 = arith.constant 0 : index
    %c0_4 = arith.constant 0 : index
    %3 = vector.load %arg0[%c0_3, %c0_4] : memref<8x128xf32, #tpu.memory_space<vmem>>, vector<8x128xf32>
    %cst = arith.constant dense<0.000000e+00> : vector<8x512xf32>
    %4 = tpu.matmul %3, %0, %cst {dimension_numbers = #tpu.dot_dimension_numbers<[1], [0], [0], [1], [0, 0, 1, 1], [], []>} : vector<8x128xf32>, vector<128x512xf32>, vector<8x512xf32> -> vector<8x512xf32>
    %5 = vector.broadcast %1 : vector<1x512xf32> to vector<8x512xf32>
    %6 = arith.addf %4, %5 : vector<8x512xf32>
    %7 = vector.extract_strided_slice %6 {offsets = [0, 0], sizes = [1, 512], strides = [1, 1]} : vector<8x512xf32> to vector<1x512xf32>
    %cst_5 = arith.constant dense<0.000000e+00> : vector<1x512xf32>
    %8 = tpu.matmul %2, %0, %cst_5 {dimension_numbers = #tpu.dot_dimension_numbers<[1], [0], [0], [1], [0, 0, 1, 1], [], []>} : vector<1x128xf32>, vector<128x512xf32>, vector<1x512xf32> -> vector<1x512xf32>
    %9 = arith.addf %7, %8 : vector<1x512xf32>
    %10 = math.tanh %9 : vector<1x512xf32>
    %11 = vector.extract_strided_slice %10 {offsets = [0, 0], sizes = [1, 128], strides = [1, 1]} : vector<1x512xf32> to vector<1x128xf32>
    %cst_6 = arith.constant 5.000000e-01 : f32
    %12 = vector.broadcast %cst_6 : f32 to vector<1x128xf32>
    %13 = arith.mulf %12, %11 : vector<1x128xf32>
    %cst_7 = arith.constant 5.000000e-01 : f32
    %14 = vector.broadcast %cst_7 : f32 to vector<1x128xf32>
    %15 = arith.addf %13, %14 : vector<1x128xf32>
    %16 = vector.extract_strided_slice %10 {offsets = [0, 128], sizes = [1, 128], strides = [1, 1]} : vector<1x512xf32> to vector<1x128xf32>
    %cst_8 = arith.constant 5.000000e-01 : f32
    %17 = vector.broadcast %cst_8 : f32 to vector<1x128xf32>
    %18 = arith.mulf %17, %16 : vector<1x128xf32>
    %cst_9 = arith.constant 5.000000e-01 : f32
    %19 = vector.broadcast %cst_9 : f32 to vector<1x128xf32>
    %20 = arith.addf %18, %19 : vector<1x128xf32>
    %21 = vector.extract_strided_slice %10 {offsets = [0, 256], sizes = [1, 128], strides = [1, 1]} : vector<1x512xf32> to vector<1x128xf32>
    %22 = vector.extract_strided_slice %10 {offsets = [0, 384], sizes = [1, 128], strides = [1, 1]} : vector<1x512xf32> to vector<1x128xf32>
    %cst_10 = arith.constant 5.000000e-01 : f32
    %23 = vector.broadcast %cst_10 : f32 to vector<1x128xf32>
    %24 = arith.mulf %23, %22 : vector<1x128xf32>
    %cst_11 = arith.constant 5.000000e-01 : f32
    %25 = vector.broadcast %cst_11 : f32 to vector<1x128xf32>
    %26 = arith.addf %24, %25 : vector<1x128xf32>
    %27 = arith.mulf %20, %2 : vector<1x128xf32>
    %28 = arith.mulf %15, %21 : vector<1x128xf32>
    %29 = arith.addf %27, %28 : vector<1x128xf32>
    %30 = math.tanh %29 : vector<1x128xf32>
    %31 = arith.mulf %26, %30 : vector<1x128xf32>
    %32 = vector.extract_strided_slice %6 {offsets = [1, 0], sizes = [1, 512], strides = [1, 1]} : vector<8x512xf32> to vector<1x512xf32>
    %cst_12 = arith.constant dense<0.000000e+00> : vector<1x512xf32>
    %33 = tpu.matmul %31, %0, %cst_12 {dimension_numbers = #tpu.dot_dimension_numbers<[1], [0], [0], [1], [0, 0, 1, 1], [], []>} : vector<1x128xf32>, vector<128x512xf32>, vector<1x512xf32> -> vector<1x512xf32>
    %34 = arith.addf %32, %33 : vector<1x512xf32>
    %35 = math.tanh %34 : vector<1x512xf32>
    %36 = vector.extract_strided_slice %35 {offsets = [0, 0], sizes = [1, 128], strides = [1, 1]} : vector<1x512xf32> to vector<1x128xf32>
    %cst_13 = arith.constant 5.000000e-01 : f32
    %37 = vector.broadcast %cst_13 : f32 to vector<1x128xf32>
    %38 = arith.mulf %37, %36 : vector<1x128xf32>
    %cst_14 = arith.constant 5.000000e-01 : f32
    %39 = vector.broadcast %cst_14 : f32 to vector<1x128xf32>
    %40 = arith.addf %38, %39 : vector<1x128xf32>
    %41 = vector.extract_strided_slice %35 {offsets = [0, 128], sizes = [1, 128], strides = [1, 1]} : vector<1x512xf32> to vector<1x128xf32>
    %cst_15 = arith.constant 5.000000e-01 : f32
    %42 = vector.broadcast %cst_15 : f32 to vector<1x128xf32>
    %43 = arith.mulf %42, %41 : vector<1x128xf32>
    %cst_16 = arith.constant 5.000000e-01 : f32
    %44 = vector.broadcast %cst_16 : f32 to vector<1x128xf32>
    %45 = arith.addf %43, %44 : vector<1x128xf32>
    %46 = vector.extract_strided_slice %35 {offsets = [0, 256], sizes = [1, 128], strides = [1, 1]} : vector<1x512xf32> to vector<1x128xf32>
    %47 = vector.extract_strided_slice %35 {offsets = [0, 384], sizes = [1, 128], strides = [1, 1]} : vector<1x512xf32> to vector<1x128xf32>
    %cst_17 = arith.constant 5.000000e-01 : f32
    %48 = vector.broadcast %cst_17 : f32 to vector<1x128xf32>
    %49 = arith.mulf %48, %47 : vector<1x128xf32>
    %cst_18 = arith.constant 5.000000e-01 : f32
    %50 = vector.broadcast %cst_18 : f32 to vector<1x128xf32>
    %51 = arith.addf %49, %50 : vector<1x128xf32>
    %52 = arith.mulf %45, %29 : vector<1x128xf32>
    %53 = arith.mulf %40, %46 : vector<1x128xf32>
    %54 = arith.addf %52, %53 : vector<1x128xf32>
    %55 = math.tanh %54 : vector<1x128xf32>
    %56 = arith.mulf %51, %55 : vector<1x128xf32>
    %57 = vector.extract_strided_slice %6 {offsets = [2, 0], sizes = [1, 512], strides = [1, 1]} : vector<8x512xf32> to vector<1x512xf32>
    %cst_19 = arith.constant dense<0.000000e+00> : vector<1x512xf32>
    %58 = tpu.matmul %56, %0, %cst_19 {dimension_numbers = #tpu.dot_dimension_numbers<[1], [0], [0], [1], [0, 0, 1, 1], [], []>} : vector<1x128xf32>, vector<128x512xf32>, vector<1x512xf32> -> vector<1x512xf32>
    %59 = arith.addf %57, %58 : vector<1x512xf32>
    %60 = math.tanh %59 : vector<1x512xf32>
    %61 = vector.extract_strided_slice %60 {offsets = [0, 0], sizes = [1, 128], strides = [1, 1]} : vector<1x512xf32> to vector<1x128xf32>
    %cst_20 = arith.constant 5.000000e-01 : f32
    %62 = vector.broadcast %cst_20 : f32 to vector<1x128xf32>
    %63 = arith.mulf %62, %61 : vector<1x128xf32>
    %cst_21 = arith.constant 5.000000e-01 : f32
    %64 = vector.broadcast %cst_21 : f32 to vector<1x128xf32>
    %65 = arith.addf %63, %64 : vector<1x128xf32>
    %66 = vector.extract_strided_slice %60 {offsets = [0, 128], sizes = [1, 128], strides = [1, 1]} : vector<1x512xf32> to vector<1x128xf32>
    %cst_22 = arith.constant 5.000000e-01 : f32
    %67 = vector.broadcast %cst_22 : f32 to vector<1x128xf32>
    %68 = arith.mulf %67, %66 : vector<1x128xf32>
    %cst_23 = arith.constant 5.000000e-01 : f32
    %69 = vector.broadcast %cst_23 : f32 to vector<1x128xf32>
    %70 = arith.addf %68, %69 : vector<1x128xf32>
    %71 = vector.extract_strided_slice %60 {offsets = [0, 256], sizes = [1, 128], strides = [1, 1]} : vector<1x512xf32> to vector<1x128xf32>
    %72 = vector.extract_strided_slice %60 {offsets = [0, 384], sizes = [1, 128], strides = [1, 1]} : vector<1x512xf32> to vector<1x128xf32>
    %cst_24 = arith.constant 5.000000e-01 : f32
    %73 = vector.broadcast %cst_24 : f32 to vector<1x128xf32>
    %74 = arith.mulf %73, %72 : vector<1x128xf32>
    %cst_25 = arith.constant 5.000000e-01 : f32
    %75 = vector.broadcast %cst_25 : f32 to vector<1x128xf32>
    %76 = arith.addf %74, %75 : vector<1x128xf32>
    %77 = arith.mulf %70, %54 : vector<1x128xf32>
    %78 = arith.mulf %65, %71 : vector<1x128xf32>
    %79 = arith.addf %77, %78 : vector<1x128xf32>
    %80 = math.tanh %79 : vector<1x128xf32>
    %81 = arith.mulf %76, %80 : vector<1x128xf32>
    %82 = vector.extract_strided_slice %6 {offsets = [3, 0], sizes = [1, 512], strides = [1, 1]} : vector<8x512xf32> to vector<1x512xf32>
    %cst_26 = arith.constant dense<0.000000e+00> : vector<1x512xf32>
    %83 = tpu.matmul %81, %0, %cst_26 {dimension_numbers = #tpu.dot_dimension_numbers<[1], [0], [0], [1], [0, 0, 1, 1], [], []>} : vector<1x128xf32>, vector<128x512xf32>, vector<1x512xf32> -> vector<1x512xf32>
    %84 = arith.addf %82, %83 : vector<1x512xf32>
    %85 = math.tanh %84 : vector<1x512xf32>
    %86 = vector.extract_strided_slice %85 {offsets = [0, 0], sizes = [1, 128], strides = [1, 1]} : vector<1x512xf32> to vector<1x128xf32>
    %cst_27 = arith.constant 5.000000e-01 : f32
    %87 = vector.broadcast %cst_27 : f32 to vector<1x128xf32>
    %88 = arith.mulf %87, %86 : vector<1x128xf32>
    %cst_28 = arith.constant 5.000000e-01 : f32
    %89 = vector.broadcast %cst_28 : f32 to vector<1x128xf32>
    %90 = arith.addf %88, %89 : vector<1x128xf32>
    %91 = vector.extract_strided_slice %85 {offsets = [0, 128], sizes = [1, 128], strides = [1, 1]} : vector<1x512xf32> to vector<1x128xf32>
    %cst_29 = arith.constant 5.000000e-01 : f32
    %92 = vector.broadcast %cst_29 : f32 to vector<1x128xf32>
    %93 = arith.mulf %92, %91 : vector<1x128xf32>
    %cst_30 = arith.constant 5.000000e-01 : f32
    %94 = vector.broadcast %cst_30 : f32 to vector<1x128xf32>
    %95 = arith.addf %93, %94 : vector<1x128xf32>
    %96 = vector.extract_strided_slice %85 {offsets = [0, 256], sizes = [1, 128], strides = [1, 1]} : vector<1x512xf32> to vector<1x128xf32>
    %97 = vector.extract_strided_slice %85 {offsets = [0, 384], sizes = [1, 128], strides = [1, 1]} : vector<1x512xf32> to vector<1x128xf32>
    %cst_31 = arith.constant 5.000000e-01 : f32
    %98 = vector.broadcast %cst_31 : f32 to vector<1x128xf32>
    %99 = arith.mulf %98, %97 : vector<1x128xf32>
    %cst_32 = arith.constant 5.000000e-01 : f32
    %100 = vector.broadcast %cst_32 : f32 to vector<1x128xf32>
    %101 = arith.addf %99, %100 : vector<1x128xf32>
    %102 = arith.mulf %95, %79 : vector<1x128xf32>
    %103 = arith.mulf %90, %96 : vector<1x128xf32>
    %104 = arith.addf %102, %103 : vector<1x128xf32>
    %105 = math.tanh %104 : vector<1x128xf32>
    %106 = arith.mulf %101, %105 : vector<1x128xf32>
    %107 = vector.extract_strided_slice %6 {offsets = [4, 0], sizes = [1, 512], strides = [1, 1]} : vector<8x512xf32> to vector<1x512xf32>
    %cst_33 = arith.constant dense<0.000000e+00> : vector<1x512xf32>
    %108 = tpu.matmul %106, %0, %cst_33 {dimension_numbers = #tpu.dot_dimension_numbers<[1], [0], [0], [1], [0, 0, 1, 1], [], []>} : vector<1x128xf32>, vector<128x512xf32>, vector<1x512xf32> -> vector<1x512xf32>
    %109 = arith.addf %107, %108 : vector<1x512xf32>
    %110 = math.tanh %109 : vector<1x512xf32>
    %111 = vector.extract_strided_slice %110 {offsets = [0, 0], sizes = [1, 128], strides = [1, 1]} : vector<1x512xf32> to vector<1x128xf32>
    %cst_34 = arith.constant 5.000000e-01 : f32
    %112 = vector.broadcast %cst_34 : f32 to vector<1x128xf32>
    %113 = arith.mulf %112, %111 : vector<1x128xf32>
    %cst_35 = arith.constant 5.000000e-01 : f32
    %114 = vector.broadcast %cst_35 : f32 to vector<1x128xf32>
    %115 = arith.addf %113, %114 : vector<1x128xf32>
    %116 = vector.extract_strided_slice %110 {offsets = [0, 128], sizes = [1, 128], strides = [1, 1]} : vector<1x512xf32> to vector<1x128xf32>
    %cst_36 = arith.constant 5.000000e-01 : f32
    %117 = vector.broadcast %cst_36 : f32 to vector<1x128xf32>
    %118 = arith.mulf %117, %116 : vector<1x128xf32>
    %cst_37 = arith.constant 5.000000e-01 : f32
    %119 = vector.broadcast %cst_37 : f32 to vector<1x128xf32>
    %120 = arith.addf %118, %119 : vector<1x128xf32>
    %121 = vector.extract_strided_slice %110 {offsets = [0, 256], sizes = [1, 128], strides = [1, 1]} : vector<1x512xf32> to vector<1x128xf32>
    %122 = vector.extract_strided_slice %110 {offsets = [0, 384], sizes = [1, 128], strides = [1, 1]} : vector<1x512xf32> to vector<1x128xf32>
    %cst_38 = arith.constant 5.000000e-01 : f32
    %123 = vector.broadcast %cst_38 : f32 to vector<1x128xf32>
    %124 = arith.mulf %123, %122 : vector<1x128xf32>
    %cst_39 = arith.constant 5.000000e-01 : f32
    %125 = vector.broadcast %cst_39 : f32 to vector<1x128xf32>
    %126 = arith.addf %124, %125 : vector<1x128xf32>
    %127 = arith.mulf %120, %104 : vector<1x128xf32>
    %128 = arith.mulf %115, %121 : vector<1x128xf32>
    %129 = arith.addf %127, %128 : vector<1x128xf32>
    %130 = math.tanh %129 : vector<1x128xf32>
    %131 = arith.mulf %126, %130 : vector<1x128xf32>
    %132 = vector.extract_strided_slice %6 {offsets = [5, 0], sizes = [1, 512], strides = [1, 1]} : vector<8x512xf32> to vector<1x512xf32>
    %cst_40 = arith.constant dense<0.000000e+00> : vector<1x512xf32>
    %133 = tpu.matmul %131, %0, %cst_40 {dimension_numbers = #tpu.dot_dimension_numbers<[1], [0], [0], [1], [0, 0, 1, 1], [], []>} : vector<1x128xf32>, vector<128x512xf32>, vector<1x512xf32> -> vector<1x512xf32>
    %134 = arith.addf %132, %133 : vector<1x512xf32>
    %135 = math.tanh %134 : vector<1x512xf32>
    %136 = vector.extract_strided_slice %135 {offsets = [0, 0], sizes = [1, 128], strides = [1, 1]} : vector<1x512xf32> to vector<1x128xf32>
    %cst_41 = arith.constant 5.000000e-01 : f32
    %137 = vector.broadcast %cst_41 : f32 to vector<1x128xf32>
    %138 = arith.mulf %137, %136 : vector<1x128xf32>
    %cst_42 = arith.constant 5.000000e-01 : f32
    %139 = vector.broadcast %cst_42 : f32 to vector<1x128xf32>
    %140 = arith.addf %138, %139 : vector<1x128xf32>
    %141 = vector.extract_strided_slice %135 {offsets = [0, 128], sizes = [1, 128], strides = [1, 1]} : vector<1x512xf32> to vector<1x128xf32>
    %cst_43 = arith.constant 5.000000e-01 : f32
    %142 = vector.broadcast %cst_43 : f32 to vector<1x128xf32>
    %143 = arith.mulf %142, %141 : vector<1x128xf32>
    %cst_44 = arith.constant 5.000000e-01 : f32
    %144 = vector.broadcast %cst_44 : f32 to vector<1x128xf32>
    %145 = arith.addf %143, %144 : vector<1x128xf32>
    %146 = vector.extract_strided_slice %135 {offsets = [0, 256], sizes = [1, 128], strides = [1, 1]} : vector<1x512xf32> to vector<1x128xf32>
    %147 = vector.extract_strided_slice %135 {offsets = [0, 384], sizes = [1, 128], strides = [1, 1]} : vector<1x512xf32> to vector<1x128xf32>
    %cst_45 = arith.constant 5.000000e-01 : f32
    %148 = vector.broadcast %cst_45 : f32 to vector<1x128xf32>
    %149 = arith.mulf %148, %147 : vector<1x128xf32>
    %cst_46 = arith.constant 5.000000e-01 : f32
    %150 = vector.broadcast %cst_46 : f32 to vector<1x128xf32>
    %151 = arith.addf %149, %150 : vector<1x128xf32>
    %152 = arith.mulf %145, %129 : vector<1x128xf32>
    %153 = arith.mulf %140, %146 : vector<1x128xf32>
    %154 = arith.addf %152, %153 : vector<1x128xf32>
    %155 = math.tanh %154 : vector<1x128xf32>
    %156 = arith.mulf %151, %155 : vector<1x128xf32>
    %157 = vector.extract_strided_slice %6 {offsets = [6, 0], sizes = [1, 512], strides = [1, 1]} : vector<8x512xf32> to vector<1x512xf32>
    %cst_47 = arith.constant dense<0.000000e+00> : vector<1x512xf32>
    %158 = tpu.matmul %156, %0, %cst_47 {dimension_numbers = #tpu.dot_dimension_numbers<[1], [0], [0], [1], [0, 0, 1, 1], [], []>} : vector<1x128xf32>, vector<128x512xf32>, vector<1x512xf32> -> vector<1x512xf32>
    %159 = arith.addf %157, %158 : vector<1x512xf32>
    %160 = math.tanh %159 : vector<1x512xf32>
    %161 = vector.extract_strided_slice %160 {offsets = [0, 0], sizes = [1, 128], strides = [1, 1]} : vector<1x512xf32> to vector<1x128xf32>
    %cst_48 = arith.constant 5.000000e-01 : f32
    %162 = vector.broadcast %cst_48 : f32 to vector<1x128xf32>
    %163 = arith.mulf %162, %161 : vector<1x128xf32>
    %cst_49 = arith.constant 5.000000e-01 : f32
    %164 = vector.broadcast %cst_49 : f32 to vector<1x128xf32>
    %165 = arith.addf %163, %164 : vector<1x128xf32>
    %166 = vector.extract_strided_slice %160 {offsets = [0, 128], sizes = [1, 128], strides = [1, 1]} : vector<1x512xf32> to vector<1x128xf32>
    %cst_50 = arith.constant 5.000000e-01 : f32
    %167 = vector.broadcast %cst_50 : f32 to vector<1x128xf32>
    %168 = arith.mulf %167, %166 : vector<1x128xf32>
    %cst_51 = arith.constant 5.000000e-01 : f32
    %169 = vector.broadcast %cst_51 : f32 to vector<1x128xf32>
    %170 = arith.addf %168, %169 : vector<1x128xf32>
    %171 = vector.extract_strided_slice %160 {offsets = [0, 256], sizes = [1, 128], strides = [1, 1]} : vector<1x512xf32> to vector<1x128xf32>
    %172 = vector.extract_strided_slice %160 {offsets = [0, 384], sizes = [1, 128], strides = [1, 1]} : vector<1x512xf32> to vector<1x128xf32>
    %cst_52 = arith.constant 5.000000e-01 : f32
    %173 = vector.broadcast %cst_52 : f32 to vector<1x128xf32>
    %174 = arith.mulf %173, %172 : vector<1x128xf32>
    %cst_53 = arith.constant 5.000000e-01 : f32
    %175 = vector.broadcast %cst_53 : f32 to vector<1x128xf32>
    %176 = arith.addf %174, %175 : vector<1x128xf32>
    %177 = arith.mulf %170, %154 : vector<1x128xf32>
    %178 = arith.mulf %165, %171 : vector<1x128xf32>
    %179 = arith.addf %177, %178 : vector<1x128xf32>
    %180 = math.tanh %179 : vector<1x128xf32>
    %181 = arith.mulf %176, %180 : vector<1x128xf32>
    %182 = vector.extract_strided_slice %6 {offsets = [7, 0], sizes = [1, 512], strides = [1, 1]} : vector<8x512xf32> to vector<1x512xf32>
    %cst_54 = arith.constant dense<0.000000e+00> : vector<1x512xf32>
    %183 = tpu.matmul %181, %0, %cst_54 {dimension_numbers = #tpu.dot_dimension_numbers<[1], [0], [0], [1], [0, 0, 1, 1], [], []>} : vector<1x128xf32>, vector<128x512xf32>, vector<1x512xf32> -> vector<1x512xf32>
    %184 = arith.addf %182, %183 : vector<1x512xf32>
    %185 = math.tanh %184 : vector<1x512xf32>
    %186 = vector.extract_strided_slice %185 {offsets = [0, 0], sizes = [1, 128], strides = [1, 1]} : vector<1x512xf32> to vector<1x128xf32>
    %cst_55 = arith.constant 5.000000e-01 : f32
    %187 = vector.broadcast %cst_55 : f32 to vector<1x128xf32>
    %188 = arith.mulf %187, %186 : vector<1x128xf32>
    %cst_56 = arith.constant 5.000000e-01 : f32
    %189 = vector.broadcast %cst_56 : f32 to vector<1x128xf32>
    %190 = arith.addf %188, %189 : vector<1x128xf32>
    %191 = vector.extract_strided_slice %185 {offsets = [0, 128], sizes = [1, 128], strides = [1, 1]} : vector<1x512xf32> to vector<1x128xf32>
    %cst_57 = arith.constant 5.000000e-01 : f32
    %192 = vector.broadcast %cst_57 : f32 to vector<1x128xf32>
    %193 = arith.mulf %192, %191 : vector<1x128xf32>
    %cst_58 = arith.constant 5.000000e-01 : f32
    %194 = vector.broadcast %cst_58 : f32 to vector<1x128xf32>
    %195 = arith.addf %193, %194 : vector<1x128xf32>
    %196 = vector.extract_strided_slice %185 {offsets = [0, 256], sizes = [1, 128], strides = [1, 1]} : vector<1x512xf32> to vector<1x128xf32>
    %197 = vector.extract_strided_slice %185 {offsets = [0, 384], sizes = [1, 128], strides = [1, 1]} : vector<1x512xf32> to vector<1x128xf32>
    %cst_59 = arith.constant 5.000000e-01 : f32
    %198 = vector.broadcast %cst_59 : f32 to vector<1x128xf32>
    %199 = arith.mulf %198, %197 : vector<1x128xf32>
    %cst_60 = arith.constant 5.000000e-01 : f32
    %200 = vector.broadcast %cst_60 : f32 to vector<1x128xf32>
    %201 = arith.addf %199, %200 : vector<1x128xf32>
    %202 = arith.mulf %195, %179 : vector<1x128xf32>
    %203 = arith.mulf %190, %196 : vector<1x128xf32>
    %204 = arith.addf %202, %203 : vector<1x128xf32>
    %205 = math.tanh %204 : vector<1x128xf32>
    %206 = arith.mulf %201, %205 : vector<1x128xf32>
    %cst_61 = arith.constant 0.000000e+00 : f32
    %207 = vector.broadcast %cst_61 : f32 to vector<1x128xf32>
    %208 = arith.maximumf %206, %207 : vector<1x128xf32>
    %c0_62 = arith.constant 0 : index
    %c512 = arith.constant 512 : index
    %209 = vector.load %arg1[%c0_62, %c512] : memref<136x640xf32, #tpu.memory_space<vmem>>, vector<128x128xf32>
    %c130 = arith.constant 130 : index
    %c512_63 = arith.constant 512 : index
    %210 = vector.load %arg1[%c130, %c512_63] : memref<136x640xf32, #tpu.memory_space<vmem>>, vector<1x128xf32>
    %cst_64 = arith.constant dense<0.000000e+00> : vector<1x128xf32>
    %211 = tpu.matmul %208, %209, %cst_64 {dimension_numbers = #tpu.dot_dimension_numbers<[1], [0], [0], [1], [0, 0, 1, 1], [], []>} : vector<1x128xf32>, vector<128x128xf32>, vector<1x128xf32> -> vector<1x128xf32>
    %212 = arith.addf %211, %210 : vector<1x128xf32>
    %cst_65 = arith.constant 0.000000e+00 : f32
    %213 = vector.broadcast %cst_65 : f32 to vector<1x128xf32>
    %214 = arith.maximumf %212, %213 : vector<1x128xf32>
    %c0_66 = arith.constant 0 : index
    %c0_67 = arith.constant 0 : index
    %215 = vector.load %arg1[%c0_66, %c0_67] : memref<136x640xf32, #tpu.memory_space<vmem>>, vector<128x128xf32>
    %c130_68 = arith.constant 130 : index
    %c0_69 = arith.constant 0 : index
    %216 = vector.load %arg1[%c130_68, %c0_69] : memref<136x640xf32, #tpu.memory_space<vmem>>, vector<1x128xf32>
    %cst_70 = arith.constant dense<0.000000e+00> : vector<1x128xf32>
    %217 = tpu.matmul %214, %215, %cst_70 {dimension_numbers = #tpu.dot_dimension_numbers<[1], [0], [0], [1], [0, 0, 1, 1], [], []>} : vector<1x128xf32>, vector<128x128xf32>, vector<1x128xf32> -> vector<1x128xf32>
    %218 = arith.addf %217, %216 : vector<1x128xf32>
    %cst_71 = arith.constant 0.000000e+00 : f32
    %219 = vector.broadcast %cst_71 : f32 to vector<1x128xf32>
    %220 = arith.maximumf %218, %219 : vector<1x128xf32>
    %c0_72 = arith.constant 0 : index
    %c128_73 = arith.constant 128 : index
    %221 = vector.load %arg1[%c0_72, %c128_73] : memref<136x640xf32, #tpu.memory_space<vmem>>, vector<128x128xf32>
    %c130_74 = arith.constant 130 : index
    %c128_75 = arith.constant 128 : index
    %222 = vector.load %arg1[%c130_74, %c128_75] : memref<136x640xf32, #tpu.memory_space<vmem>>, vector<1x128xf32>
    %cst_76 = arith.constant dense<0.000000e+00> : vector<1x128xf32>
    %223 = tpu.matmul %220, %221, %cst_76 {dimension_numbers = #tpu.dot_dimension_numbers<[1], [0], [0], [1], [0, 0, 1, 1], [], []>} : vector<1x128xf32>, vector<128x128xf32>, vector<1x128xf32> -> vector<1x128xf32>
    %224 = arith.addf %223, %222 : vector<1x128xf32>
    %cst_77 = arith.constant 0.000000e+00 : f32
    %225 = vector.broadcast %cst_77 : f32 to vector<1x128xf32>
    %226 = arith.maximumf %224, %225 : vector<1x128xf32>
    %c0_78 = arith.constant 0 : index
    %c256 = arith.constant 256 : index
    %227 = vector.load %arg1[%c0_78, %c256] : memref<136x640xf32, #tpu.memory_space<vmem>>, vector<128x128xf32>
    %c130_79 = arith.constant 130 : index
    %c256_80 = arith.constant 256 : index
    %228 = vector.load %arg1[%c130_79, %c256_80] : memref<136x640xf32, #tpu.memory_space<vmem>>, vector<1x128xf32>
    %cst_81 = arith.constant dense<0.000000e+00> : vector<1x128xf32>
    %229 = tpu.matmul %226, %227, %cst_81 {dimension_numbers = #tpu.dot_dimension_numbers<[1], [0], [0], [1], [0, 0, 1, 1], [], []>} : vector<1x128xf32>, vector<128x128xf32>, vector<1x128xf32> -> vector<1x128xf32>
    %230 = arith.addf %229, %228 : vector<1x128xf32>
    %cst_82 = arith.constant 0.000000e+00 : f32
    %231 = vector.broadcast %cst_82 : f32 to vector<1x128xf32>
    %232 = arith.maximumf %230, %231 : vector<1x128xf32>
    %c0_83 = arith.constant 0 : index
    %c0_84 = arith.constant 0 : index
    %233 = vector.load %arg2[%c0_83, %c0_84] : memref<1x128xf32, #tpu.memory_space<vmem>>, vector<1x128xf32>
    tpu.vector_store %arg2[%c0_83, %c0_84], %232 {strides = array<i32>} : memref<1x128xf32, #tpu.memory_space<vmem>>, vector<1x128xf32>,
    return
  }
}

</mosaic_0001>

<llo_original>
// kernel: seq_regressor_forward.1
$region0: #{seq_regressor_forward.1}
  #allocation0 [shape = 'u32[]', space=smem, size = 0x4, offset = 0x4, fixed_abs, tag = 'smem constant byte address 0x4 - core index']
  #allocation1 [shape = 'u32[144,128]{1,0:T(1,128)}', space=vmem, size = 0x12000, scoped, tag = 'internal scratch']
  %s0 = inlined_call_operand.vmem [shape: f32[8,128], index: 0, kind: input, shape index: {}]
  %s1 = inlined_call_operand.hbm [shape: f32[136,640], index: 1, kind: input, shape index: {}]
  %s2 = inlined_call_operand.vmem [shape: f32[1,128], index: 2, kind: output, shape index: {}]
  %s3 = sld [smem:[#allocation0]]
  $region22: #{seq_regressor_forward.1} parent=0
    _
  %s5 = ssub.s32 1, %s3
  %s6 = scalar_select 0, %s5, %s3
  $region1: #{seq_regressor_forward.1} parent=0
    #allocation2 [shape = 'u8[348160]{0}', space=vmem, size = 0x55000, scoped, tag = 'input window, operand 1, single buffered']
    #allocation3 [shape = 's32[1]{0}', space=sflag, size = 0x4, scoped, tag = 'scoped memory for seq_regressor_forward.1']
    %7 = vsyncpa [#allocation3], 0
    // Predicated region
    $region2: #{seq_regressor_forward.1} parent=1 // pred_check
      _
    $region3: #{seq_regressor_forward.1} parent=1 // pred_check_branch
      %9 = sbr.rel (0) target = $region5
    $region4: #{seq_regressor_forward.1} parent=1 // pred_region
      _
    $region5: #{seq_regressor_forward.1} parent=1 // pred_fallthru
      _
    // Predicated region
    $region6: #{seq_regressor_forward.1} parent=1 // pred_check
      _
    $region7: #{seq_regressor_forward.1} parent=1 // pred_check_branch
      %11 = sbr.rel (0) target = $region9
    $region8: #{seq_regressor_forward.1} parent=1 // pred_region
      %s13 = ssub.s32 10880, 10880
      %14 = vsyncadd [#allocation3], %s13
      %s15 = sshll.u32 [#allocation2], 4
      %s16 = int_to_ptr.vmem [resolvable:$true] %s15
      %21 = dma.hbm_to_vmem [thread:$0]  %s1, 10880, %s16, [#allocation3], 640, 640, 40
    $region9: #{seq_regressor_forward.1} parent=1 // pred_fallthru
      _
    // Predicated region
    $region10: #{seq_regressor_forward.1} parent=1 // pred_check
      _
    $region11: #{seq_regressor_forward.1} parent=1 // pred_check_branch
      %23 = sbr.rel (0) target = $region13
    $region12: #{seq_regressor_forward.1} parent=1 // pred_region
      %24 = dma.done [#allocation3], 10880
    $region13: #{seq_regressor_forward.1} parent=1 // pred_fallthru
      _
    %v25 = vld [vmem:[#allocation2] sm:$0xff]
    %v26 = vld [vmem:[#allocation2 + $0x8] sm:$0xff]
    %v27 = vld [vmem:[#allocation2 + $0x10] sm:$0xff]
    %v28 = vld [vmem:[#allocation2 + $0x18] sm:$0xff]
    %v29 = vld [vmem:[#allocation2 + $0x28] sm:$0xff]
    %v30 = vld [vmem:[#allocation2 + $0x30] sm:$0xff]
    %v31 = vld [vmem:[#allocation2 + $0x38] sm:$0xff]
    %v32 = vld [vmem:[#allocation2 + $0x40] sm:$0xff]
    %v33 = vld [vmem:[#allocation2 + $0x50] sm:$0xff]
    %v34 = vld [vmem:[#allocation2 + $0x58] sm:$0xff]
    %v35 = vld [vmem:[#allocation2 + $0x60] sm:$0xff]
    %v36 = vld [vmem:[#allocation2 + $0x68] sm:$0xff]
    %v37 = vld [vmem:[#allocation2 + $0x78] sm:$0xff]
    %v38 = vld [vmem:[#allocation2 + $0x80] sm:$0xff]
    %v39 = vld [vmem:[#allocation2 + $0x88] sm:$0xff]
    %v40 = vld [vmem:[#allocation2 + $0x90] sm:$0xff]
    %v41 = vld [vmem:[#allocation2 + $0xa0] sm:$0xff]
    %v42 = vld [vmem:[#allocation2 + $0xa8] sm:$0xff]
    %v43 = vld [vmem:[#allocation2 + $0xb0] sm:$0xff]
    %v44 = vld [vmem:[#allocation2 + $0xb8] sm:$0xff]
    %v45 = vld [vmem:[#allocation2 + $0xc8] sm:$0xff]
    %v46 = vld [vmem:[#allocation2 + $0xd0] sm:$0xff]
    %v47 = vld [vmem:[#allocation2 + $0xd8] sm:$0xff]
    %v48 = vld [vmem:[#allocation2 + $0xe0] sm:$0xff]
    %v49 = vld [vmem:[#allocation2 + $0xf0] sm:$0xff]
    %v50 = vld [vmem:[#allocation2 + $0xf8] sm:$0xff]
    %v51 = vld [vmem:[#allocation2 + $0x100] sm:$0xff]
    %v52 = vld [vmem:[#allocation2 + $0x108] sm:$0xff]
    %v53 = vld [vmem:[#allocation2 + $0x118] sm:$0xff]
    %v54 = vld [vmem:[#allocation2 + $0x120] sm:$0xff]
    %v55 = vld [vmem:[#allocation2 + $0x128] sm:$0xff]
    %v56 = vld [vmem:[#allocation2 + $0x130] sm:$0xff]
    %v57 = vld [vmem:[#allocation2 + $0x140] sm:$0xff]
    %v58 = vld [vmem:[#allocation2 + $0x148] sm:$0xff]
    %v59 = vld [vmem:[#allocation2 + $0x150] sm:$0xff]
    %v60 = vld [vmem:[#allocation2 + $0x158] sm:$0xff]
    %v61 = vld [vmem:[#allocation2 + $0x168] sm:$0xff]
    %v62 = vld [vmem:[#allocation2 + $0x170] sm:$0xff]
    %v63 = vld [vmem:[#allocation2 + $0x178] sm:$0xff]
    %v64 = vld [vmem:[#allocation2 + $0x180] sm:$0xff]
    %v65 = vld [vmem:[#allocation2 + $0x190] sm:$0xff]
    %v66 = vld [vmem:[#allocation2 + $0x198] sm:$0xff]
    %v67 = vld [vmem:[#allocation2 + $0x1a0] sm:$0xff]
    %v68 = vld [vmem:[#allocation2 + $0x1a8] sm:$0xff]
    %v69 = vld [vmem:[#allocation2 + $0x1b8] sm:$0xff]
    %v70 = vld [vmem:[#allocation2 + $0x1c0] sm:$0xff]
    %v71 = vld [vmem:[#allocation2 + $0x1c8] sm:$0xff]
    %v72 = vld [vmem:[#allocation2 + $0x1d0] sm:$0xff]
    %v73 = vld [vmem:[#allocation2 + $0x1e0] sm:$0xff]
    %v74 = vld [vmem:[#allocation2 + $0x1e8] sm:$0xff]
    %v75 = vld [vmem:[#allocation2 + $0x1f0] sm:$0xff]
    %v76 = vld [vmem:[#allocation2 + $0x1f8] sm:$0xff]
    %v77 = vld [vmem:[#allocation2 + $0x208] sm:$0xff]
    %v78 = vld [vmem:[#allocation2 + $0x210] sm:$0xff]
    %v79 = vld [vmem:[#allocation2 + $0x218] sm:$0xff]
    %v80 = vld [vmem:[#allocation2 + $0x220] sm:$0xff]
    %v81 = vld [vmem:[#allocation2 + $0x230] sm:$0xff]
    %v82 = vld [vmem:[#allocation2 + $0x238] sm:$0xff]
    %v83 = vld [vmem:[#allocation2 + $0x240] sm:$0xff]
    %v84 = vld [vmem:[#allocation2 + $0x248] sm:$0xff]
    %v85 = vld [vmem:[#allocation2 + $0x258] sm:$0xff]
    %v86 = vld [vmem:[#allocation2 + $0x260] sm:$0xff]
    %v87 = vld [vmem:[#allocation2 + $0x268] sm:$0xff]
    %v88 = vld [vmem:[#allocation2 + $0x270] sm:$0xff]
    %s89 = scalar_lea.vmem [#allocation2], 640
    %v90 = vld [vmem:[%s89] ss:$8 sm:$0xf]
    %v91 = vld [vmem:[#allocation2 + $0x281] ss:$0 sm:$0xff]
    %v92 = vld [vmem:[%s0] sm:$0xff]
    %v94 = vlaneseq
    %v95 = vshrl.u32 %v94, 7
    %v96 = vsub.s32 0, %v95
    %v97 = vrot.slane %v90, %v96
    %v98 = vlaneseq
    %v99 = vshrl.u32 %v98, 7
    %v100 = vsub.s32 1, %v99
    %v101 = vrot.slane %v90, %v100
    %v102 = vlaneseq
    %v103 = vshrl.u32 %v102, 7
    %v104 = vsub.s32 2, %v103
    %v105 = vrot.slane %v90, %v104
    %v106 = vlaneseq
    %v107 = vshrl.u32 %v106, 7
    %v108 = vsub.s32 3, %v107
    %v109 = vrot.slane %v90, %v108
    %114 = vmatprep.subr.mxu0 %v86
    %115 = vmatpush1.msra.mxu0 %v85
    %116 = vmatprep.subr.mxu0 %v82
    %117 = vmatpush1.msra.mxu0 %v81
    %118 = vmatprep.subr.mxu0 %v78
    %119 = vmatpush1.msra.mxu0 %v77
    %120 = vmatprep.subr.mxu0 %v74
    %121 = vmatpush1.msra.mxu0 %v73
    %122 = vmatprep.subr.mxu0 %v70
    %123 = vmatpush1.msra.mxu0 %v69
    %124 = vmatprep.subr.mxu0 %v66
    %125 = vmatpush1.msra.mxu0 %v65
    %126 = vmatprep.subr.mxu0 %v62
    %127 = vmatpush1.msra.mxu0 %v61
    %128 = vmatprep.subr.mxu0 %v58
    %129 = vmatpush1.msra.mxu0 %v57
    %130 = vmatprep.subr.mxu0 %v54
    %131 = vmatpush1.msra.mxu0 %v53
    %132 = vmatprep.subr.mxu0 %v50
    %133 = vmatpush1.msra.mxu0 %v49
    %134 = vmatprep.subr.mxu0 %v46
    %135 = vmatpush1.msra.mxu0 %v45
    %136 = vmatprep.subr.mxu0 %v42
    %137 = vmatpush1.msra.mxu0 %v41
    %138 = vmatprep.subr.mxu0 %v38
    %139 = vmatpush1.msra.mxu0 %v37
    %140 = vmatprep.subr.mxu0 %v34
    %141 = vmatpush1.msra.mxu0 %v33
    %142 = vmatprep.subr.mxu0 %v30
    %143 = vmatpush1.msra.mxu0 %v29
    %144 = vmatprep.subr.mxu0 %v26
    %145 = vmatpush1.msra.mxu0 %v25
    %146 = vmatprep.subr.mxu0 0.0
    %147 = vmatpush2.msra.mxu0 0.0
    %148 = vmatprep.subr.mxu0 0.0
    %149 = vmatpush2.msra.mxu0 0.0
    %150 = vmatprep.subr.mxu0 0.0
    %151 = vmatpush2.msra.mxu0 0.0
    %152 = vmatprep.subr.mxu0 0.0
    %153 = vmatpush2.msra.mxu0 0.0
    %154 = vmatprep.subr.mxu0 0.0
    %155 = vmatpush2.msra.mxu0 0.0
    %156 = vmatprep.subr.mxu0 0.0
    %157 = vmatpush2.msra.mxu0 0.0
    %158 = vmatprep.subr.mxu0 0.0
    %159 = vmatpush2.msra.mxu0 0.0
    %160 = vmatprep.subr.mxu0 0.0
    %161 = vmatpush2.msra.mxu0 0.0
    %162 = vmatprep.subr.mxu0 0.0
    %163 = vmatpush2.msra.mxu0 0.0
    %164 = vmatprep.subr.mxu0 0.0
    %165 = vmatpush2.msra.mxu0 0.0
    %166 = vmatprep.subr.mxu0 0.0
    %167 = vmatpush2.msra.mxu0 0.0
    %168 = vmatprep.subr.mxu0 0.0
    %169 = vmatpush2.msra.mxu0 0.0
    %170 = vmatprep.subr.mxu0 0.0
    %171 = vmatpush2.msra.mxu0 0.0
    %172 = vmatprep.subr.mxu0 0.0
    %173 = vmatpush2.msra.mxu0 0.0
    %174 = vmatprep.subr.mxu0 0.0
    %175 = vmatpush2.msra.mxu0 0.0
    %176 = vmatprep.subr.mxu0 0.0
    %177 = vmatpush2.msra.mxu0 0.0
    %178 = vmatprep.mubr.f32.mxu0 0.0
    %179 = vmatmul.mubr.f32.gmra.mxu0 %v92
    %v180 = vpop.f32.mrf.mxu0
    %v181 = vadd.f32 %v97, %v180
    %v182 = vpop.f32.mrf.mxu0
    %v183 = vadd.f32 %v101, %v182
    %184 = vdwg.mxu0
    %185 = vmatprep.subr.mxu0 %v88
    %186 = vmatpush1.msra.mxu0 %v87
    %187 = vmatprep.subr.mxu0 %v84
    %188 = vmatpush1.msra.mxu0 %v83
    %189 = vmatprep.subr.mxu0 %v80
    %190 = vmatpush1.msra.mxu0 %v79
    %191 = vmatprep.subr.mxu0 %v76
    %192 = vmatpush1.msra.mxu0 %v75
    %193 = vmatprep.subr.mxu0 %v72
    %194 = vmatpush1.msra.mxu0 %v71
    %195 = vmatprep.subr.mxu0 %v68
    %196 = vmatpush1.msra.mxu0 %v67
    %197 = vmatprep.subr.mxu0 %v64
    %198 = vmatpush1.msra.mxu0 %v63
    %199 = vmatprep.subr.mxu0 %v60
    %200 = vmatpush1.msra.mxu0 %v59
    %201 = vmatprep.subr.mxu0 %v56
    %202 = vmatpush1.msra.mxu0 %v55
    %203 = vmatprep.subr.mxu0 %v52
    %204 = vmatpush1.msra.mxu0 %v51
    %205 = vmatprep.subr.mxu0 %v48
    %206 = vmatpush1.msra.mxu0 %v47
    %207 = vmatprep.subr.mxu0 %v44
    %208 = vmatpush1.msra.mxu0 %v43
    %209 = vmatprep.subr.mxu0 %v40
    %210 = vmatpush1.msra.mxu0 %v39
    %211 = vmatprep.subr.mxu0 %v36
    %212 = vmatpush1.msra.mxu0 %v35
    %213 = vmatprep.subr.mxu0 %v32
    %214 = vmatpush1.msra.mxu0 %v31
    %215 = vmatprep.subr.mxu0 %v28
    %216 = vmatpush1.msra.mxu0 %v27
    %217 = vmatprep.subr.mxu0 0.0
    %218 = vmatpush2.msra.mxu0 0.0
    %219 = vmatprep.subr.mxu0 0.0
    %220 = vmatpush2.msra.mxu0 0.0
    %221 = vmatprep.subr.mxu0 0.0
    %222 = vmatpush2.msra.mxu0 0.0
    %223 = vmatprep.subr.mxu0 0.0
    %224 = vmatpush2.msra.mxu0 0.0
    %225 = vmatprep.subr.mxu0 0.0
    %226 = vmatpush2.msra.mxu0 0.0
    %227 = vmatprep.subr.mxu0 0.0
    %228 = vmatpush2.msra.mxu0 0.0
    %229 = vmatprep.subr.mxu0 0.0
    %230 = vmatpush2.msra.mxu0 0.0
    %231 = vmatprep.subr.mxu0 0.0
    %232 = vmatpush2.msra.mxu0 0.0
    %233 = vmatprep.subr.mxu0 0.0
    %234 = vmatpush2.msra.mxu0 0.0
    %235 = vmatprep.subr.mxu0 0.0
    %236 = vmatpush2.msra.mxu0 0.0
    %237 = vmatprep.subr.mxu0 0.0
    %238 = vmatpush2.msra.mxu0 0.0
    %239 = vmatprep.subr.mxu0 0.0
    %240 = vmatpush2.msra.mxu0 0.0
    %241 = vmatprep.subr.mxu0 0.0
    %242 = vmatpush2.msra.mxu0 0.0
    %243 = vmatprep.subr.mxu0 0.0
    %244 = vmatpush2.msra.mxu0 0.0
    %245 = vmatprep.subr.mxu0 0.0
    %246 = vmatpush2.msra.mxu0 0.0
    %247 = vmatprep.subr.mxu0 0.0
    %248 = vmatpush2.msra.mxu0 0.0
    %249 = vmatprep.mubr.f32.mxu0 0.0
    %250 = vmatmul.mubr.f32.gmra.mxu0 %v92
    %v251 = vpop.f32.mrf.mxu0
    %v252 = vadd.f32 %v105, %v251
    %v253 = vpop.f32.mrf.mxu0
    %v254 = vadd.f32 %v109, %v253
    %255 = vdwg.mxu0
    %256 = vmatprep.subr.mxu0 %v86
    %257 = vmatpush1.msra.mxu0 %v85
    %258 = vmatprep.subr.mxu0 %v82
    %259 = vmatpush1.msra.mxu0 %v81
    %260 = vmatprep.subr.mxu0 %v78
    %261 = vmatpush1.msra.mxu0 %v77
    %262 = vmatprep.subr.mxu0 %v74
    %263 = vmatpush1.msra.mxu0 %v73
    %264 = vmatprep.subr.mxu0 %v70
    %265 = vmatpush1.msra.mxu0 %v69
    %266 = vmatprep.subr.mxu0 %v66
    %267 = vmatpush1.msra.mxu0 %v65
    %268 = vmatprep.subr.mxu0 %v62
    %269 = vmatpush1.msra.mxu0 %v61
    %270 = vmatprep.subr.mxu0 %v58
    %271 = vmatpush1.msra.mxu0 %v57
    %272 = vmatprep.subr.mxu0 %v54
    %273 = vmatpush1.msra.mxu0 %v53
    %274 = vmatprep.subr.mxu0 %v50
    %275 = vmatpush1.msra.mxu0 %v49
    %276 = vmatprep.subr.mxu0 %v46
    %277 = vmatpush1.msra.mxu0 %v45
    %278 = vmatprep.subr.mxu0 %v42
    %279 = vmatpush1.msra.mxu0 %v41
    %280 = vmatprep.subr.mxu0 %v38
    %281 = vmatpush1.msra.mxu0 %v37
    %282 = vmatprep.subr.mxu0 %v34
    %283 = vmatpush1.msra.mxu0 %v33
    %284 = vmatprep.subr.mxu0 %v30
    %285 = vmatpush1.msra.mxu0 %v29
    %286 = vmatprep.subr.mxu0 %v26
    %287 = vmatpush1.msra.mxu0 %v25
    %288 = vmatprep.subr.mxu0 0.0
    %289 = vmatpush2.msra.mxu0 0.0
    %290 = vmatprep.subr.mxu0 0.0
    %291 = vmatpush2.msra.mxu0 0.0
    %292 = vmatprep.subr.mxu0 0.0
    %293 = vmatpush2.msra.mxu0 0.0
    %294 = vmatprep.subr.mxu0 0.0
    %295 = vmatpush2.msra.mxu0 0.0
    %296 = vmatprep.subr.mxu0 0.0
    %297 = vmatpush2.msra.mxu0 0.0
    %298 = vmatprep.subr.mxu0 0.0
    %299 = vmatpush2.msra.mxu0 0.0
    %300 = vmatprep.subr.mxu0 0.0
    %301 = vmatpush2.msra.mxu0 0.0
    %302 = vmatprep.subr.mxu0 0.0
    %303 = vmatpush2.msra.mxu0 0.0
    %304 = vmatprep.subr.mxu0 0.0
    %305 = vmatpush2.msra.mxu0 0.0
    %306 = vmatprep.subr.mxu0 0.0
    %307 = vmatpush2.msra.mxu0 0.0
    %308 = vmatprep.subr.mxu0 0.0
    %309 = vmatpush2.msra.mxu0 0.0
    %310 = vmatprep.subr.mxu0 0.0
    %311 = vmatpush2.msra.mxu0 0.0
    %312 = vmatprep.subr.mxu0 0.0
    %313 = vmatpush2.msra.mxu0 0.0
    %314 = vmatprep.subr.mxu0 0.0
    %315 = vmatpush2.msra.mxu0 0.0
    %316 = vmatprep.subr.mxu0 0.0
    %317 = vmatpush2.msra.mxu0 0.0
    %318 = vmatprep.subr.mxu0 0.0
    %319 = vmatpush2.msra.mxu0 0.0
    %320 = vmatprep.mubr.f32.mxu0 0.0
    %321 = vmatmul.mubr.f32.gmra.mxu0 %v91
    %v322 = vpop.f32.mrf.mxu0
    %v323 = vadd.f32 0.0, %v322
    %v324 = vpop.f32.mrf.mxu0
    %v325 = vadd.f32 0.0, %v324
    %326 = vdwg.mxu0
    %327 = vmatprep.subr.mxu0 %v88
    %328 = vmatpush1.msra.mxu0 %v87
    %329 = vmatprep.subr.mxu0 %v84
    %330 = vmatpush1.msra.mxu0 %v83
    %331 = vmatprep.subr.mxu0 %v80
    %332 = vmatpush1.msra.mxu0 %v79
    %333 = vmatprep.subr.mxu0 %v76
    %334 = vmatpush1.msra.mxu0 %v75
    %335 = vmatprep.subr.mxu0 %v72
    %336 = vmatpush1.msra.mxu0 %v71
    %337 = vmatprep.subr.mxu0 %v68
    %338 = vmatpush1.msra.mxu0 %v67
    %339 = vmatprep.subr.mxu0 %v64
    %340 = vmatpush1.msra.mxu0 %v63
    %341 = vmatprep.subr.mxu0 %v60
    %342 = vmatpush1.msra.mxu0 %v59
    %343 = vmatprep.subr.mxu0 %v56
    %344 = vmatpush1.msra.mxu0 %v55
    %345 = vmatprep.subr.mxu0 %v52
    %346 = vmatpush1.msra.mxu0 %v51
    %347 = vmatprep.subr.mxu0 %v48
    %348 = vmatpush1.msra.mxu0 %v47
    %349 = vmatprep.subr.mxu0 %v44
    %350 = vmatpush1.msra.mxu0 %v43
    %351 = vmatprep.subr.mxu0 %v40
    %352 = vmatpush1.msra.mxu0 %v39
    %353 = vmatprep.subr.mxu0 %v36
    %354 = vmatpush1.msra.mxu0 %v35
    %355 = vmatprep.subr.mxu0 %v32
    %356 = vmatpush1.msra.mxu0 %v31
    %357 = vmatprep.subr.mxu0 %v28
    %358 = vmatpush1.msra.mxu0 %v27
    %359 = vmatprep.subr.mxu0 0.0
    %360 = vmatpush2.msra.mxu0 0.0
    %361 = vmatprep.subr.mxu0 0.0
    %362 = vmatpush2.msra.mxu0 0.0
    %363 = vmatprep.subr.mxu0 0.0
    %364 = vmatpush2.msra.mxu0 0.0
    %365 = vmatprep.subr.mxu0 0.0
    %366 = vmatpush2.msra.mxu0 0.0
    %367 = vmatprep.subr.mxu0 0.0
    %368 = vmatpush2.msra.mxu0 0.0
    %369 = vmatprep.subr.mxu0 0.0
    %370 = vmatpush2.msra.mxu0 0.0
    %371 = vmatprep.subr.mxu0 0.0
    %372 = vmatpush2.msra.mxu0 0.0
    %373 = vmatprep.subr.mxu0 0.0
    %374 = vmatpush2.msra.mxu0 0.0
    %375 = vmatprep.subr.mxu0 0.0
    %376 = vmatpush2.msra.mxu0 0.0
    %377 = vmatprep.subr.mxu0 0.0
    %378 = vmatpush2.msra.mxu0 0.0
    %379 = vmatprep.subr.mxu0 0.0
    %380 = vmatpush2.msra.mxu0 0.0
    %381 = vmatprep.subr.mxu0 0.0
    %382 = vmatpush2.msra.mxu0 0.0
    %383 = vmatprep.subr.mxu0 0.0
    %384 = vmatpush2.msra.mxu0 0.0
    %385 = vmatprep.subr.mxu0 0.0
    %386 = vmatpush2.msra.mxu0 0.0
    %387 = vmatprep.subr.mxu0 0.0
    %388 = vmatpush2.msra.mxu0 0.0
    %389 = vmatprep.subr.mxu0 0.0
    %390 = vmatpush2.msra.mxu0 0.0
    %391 = vmatprep.mubr.f32.mxu0 0.0
    %392 = vmatmul.mubr.f32.gmra.mxu0 %v91
    %v393 = vpop.f32.mrf.mxu0
    %v394 = vadd.f32 0.0, %v393
    %v395 = vpop.f32.mrf.mxu0
    %v396 = vadd.f32 0.0, %v395
    %397 = vdwg.mxu0
    %v398 = vadd.f32 %v181, %v323
    %v399 = vadd.f32 %v183, %v325
    %v400 = vadd.f32 %v252, %v394
    %v401 = vadd.f32 %v254, %v396
    %v402 = vtanh.pop %v398
    %v403 = vtanh.pop %v399
    %v404 = vtanh.pop %v400
    %v405 = vtanh.pop %v401
    %v406 = vmul.f32 %v402, 0.5
    %v407 = vadd.f32 %v406, 0.5
    %v408 = vmul.f32 %v403, 0.5
    %v409 = vadd.f32 %v408, 0.5
    %v410 = vmul.f32 %v405, 0.5
    %v411 = vadd.f32 %v410, 0.5
    %v412 = vmul.f32 %v409, %v91
    %v413 = vmul.f32 %v407, %v404
    %v414 = vadd.f32 %v412, %v413
    %v415 = vtanh.pop %v414
    %v416 = vmul.f32 %v411, %v415
    %417 = vmatprep.subr.mxu0 %v86
    %418 = vmatpush1.msra.mxu0 %v85
    %419 = vmatprep.subr.mxu0 %v82
    %420 = vmatpush1.msra.mxu0 %v81
    %421 = vmatprep.subr.mxu0 %v78
    %422 = vmatpush1.msra.mxu0 %v77
    %423 = vmatprep.subr.mxu0 %v74
    %424 = vmatpush1.msra.mxu0 %v73
    %425 = vmatprep.subr.mxu0 %v70
    %426 = vmatpush1.msra.mxu0 %v69
    %427 = vmatprep.subr.mxu0 %v66
    %428 = vmatpush1.msra.mxu0 %v65
    %429 = vmatprep.subr.mxu0 %v62
    %430 = vmatpush1.msra.mxu0 %v61
    %431 = vmatprep.subr.mxu0 %v58
    %432 = vmatpush1.msra.mxu0 %v57
    %433 = vmatprep.subr.mxu0 %v54
    %434 = vmatpush1.msra.mxu0 %v53
    %435 = vmatprep.subr.mxu0 %v50
    %436 = vmatpush1.msra.mxu0 %v49
    %437 = vmatprep.subr.mxu0 %v46
    %438 = vmatpush1.msra.mxu0 %v45
    %439 = vmatprep.subr.mxu0 %v42
    %440 = vmatpush1.msra.mxu0 %v41
    %441 = vmatprep.subr.mxu0 %v38
    %442 = vmatpush1.msra.mxu0 %v37
    %443 = vmatprep.subr.mxu0 %v34
    %444 = vmatpush1.msra.mxu0 %v33
    %445 = vmatprep.subr.mxu0 %v30
    %446 = vmatpush1.msra.mxu0 %v29
    %447 = vmatprep.subr.mxu0 %v26
    %448 = vmatpush1.msra.mxu0 %v25
    %449 = vmatprep.subr.mxu0 0.0
    %450 = vmatpush2.msra.mxu0 0.0
    %451 = vmatprep.subr.mxu0 0.0
    %452 = vmatpush2.msra.mxu0 0.0
    %453 = vmatprep.subr.mxu0 0.0
    %454 = vmatpush2.msra.mxu0 0.0
    %455 = vmatprep.subr.mxu0 0.0
    %456 = vmatpush2.msra.mxu0 0.0
    %457 = vmatprep.subr.mxu0 0.0
    %458 = vmatpush2.msra.mxu0 0.0
    %459 = vmatprep.subr.mxu0 0.0
    %460 = vmatpush2.msra.mxu0 0.0
    %461 = vmatprep.subr.mxu0 0.0
    %462 = vmatpush2.msra.mxu0 0.0
    %463 = vmatprep.subr.mxu0 0.0
    %464 = vmatpush2.msra.mxu0 0.0
    %465 = vmatprep.subr.mxu0 0.0
    %466 = vmatpush2.msra.mxu0 0.0
    %467 = vmatprep.subr.mxu0 0.0
    %468 = vmatpush2.msra.mxu0 0.0
    %469 = vmatprep.subr.mxu0 0.0
    %470 = vmatpush2.msra.mxu0 0.0
    %471 = vmatprep.subr.mxu0 0.0
    %472 = vmatpush2.msra.mxu0 0.0
    %473 = vmatprep.subr.mxu0 0.0
    %474 = vmatpush2.msra.mxu0 0.0
    %475 = vmatprep.subr.mxu0 0.0
    %476 = vmatpush2.msra.mxu0 0.0
    %477 = vmatprep.subr.mxu0 0.0
    %478 = vmatpush2.msra.mxu0 0.0
    %479 = vmatprep.subr.mxu0 0.0
    %480 = vmatpush2.msra.mxu0 0.0
    %481 = vmatprep.mubr.f32.mxu0 0.0
    %482 = vmatmul.mubr.f32.gmra.mxu0 %v416
    %v483 = vpop.f32.mrf.mxu0
    %v484 = vadd.f32 0.0, %v483
    %v485 = vpop.f32.mrf.mxu0
    %v486 = vadd.f32 0.0, %v485
    %487 = vdwg.mxu0
    %488 = vmatprep.subr.mxu0 %v88
    %489 = vmatpush1.msra.mxu0 %v87
    %490 = vmatprep.subr.mxu0 %v84
    %491 = vmatpush1.msra.mxu0 %v83
    %492 = vmatprep.subr.mxu0 %v80
    %493 = vmatpush1.msra.mxu0 %v79
    %494 = vmatprep.subr.mxu0 %v76
    %495 = vmatpush1.msra.mxu0 %v75
    %496 = vmatprep.subr.mxu0 %v72
    %497 = vmatpush1.msra.mxu0 %v71
    %498 = vmatprep.subr.mxu0 %v68
    %499 = vmatpush1.msra.mxu0 %v67
    %500 = vmatprep.subr.mxu0 %v64
    %501 = vmatpush1.msra.mxu0 %v63
    %502 = vmatprep.subr.mxu0 %v60
    %503 = vmatpush1.msra.mxu0 %v59
    %504 = vmatprep.subr.mxu0 %v56
    %505 = vmatpush1.msra.mxu0 %v55
    %506 = vmatprep.subr.mxu0 %v52
    %507 = vmatpush1.msra.mxu0 %v51
    %508 = vmatprep.subr.mxu0 %v48
    %509 = vmatpush1.msra.mxu0 %v47
    %510 = vmatprep.subr.mxu0 %v44
    %511 = vmatpush1.msra.mxu0 %v43
    %512 = vmatprep.subr.mxu0 %v40
    %513 = vmatpush1.msra.mxu0 %v39
    %514 = vmatprep.subr.mxu0 %v36
    %515 = vmatpush1.msra.mxu0 %v35
    %516 = vmatprep.subr.mxu0 %v32
    %517 = vmatpush1.msra.mxu0 %v31
    %518 = vmatprep.subr.mxu0 %v28
    %519 = vmatpush1.msra.mxu0 %v27
    %520 = vmatprep.subr.mxu0 0.0
    %521 = vmatpush2.msra.mxu0 0.0
    %522 = vmatprep.subr.mxu0 0.0
    %523 = vmatpush2.msra.mxu0 0.0
    %524 = vmatprep.subr.mxu0 0.0
    %525 = vmatpush2.msra.mxu0 0.0
    %526 = vmatprep.subr.mxu0 0.0
    %527 = vmatpush2.msra.mxu0 0.0
    %528 = vmatprep.subr.mxu0 0.0
    %529 = vmatpush2.msra.mxu0 0.0
    %530 = vmatprep.subr.mxu0 0.0
    %531 = vmatpush2.msra.mxu0 0.0
    %532 = vmatprep.subr.mxu0 0.0
    %533 = vmatpush2.msra.mxu0 0.0
    %534 = vmatprep.subr.mxu0 0.0
    %535 = vmatpush2.msra.mxu0 0.0
    %536 = vmatprep.subr.mxu0 0.0
    %537 = vmatpush2.msra.mxu0 0.0
    %538 = vmatprep.subr.mxu0 0.0
    %539 = vmatpush2.msra.mxu0 0.0
    %540 = vmatprep.subr.mxu0 0.0
    %541 = vmatpush2.msra.mxu0 0.0
    %542 = vmatprep.subr.mxu0 0.0
    %543 = vmatpush2.msra.mxu0 0.0
    %544 = vmatprep.subr.mxu0 0.0
    %545 = vmatpush2.msra.mxu0 0.0
    %546 = vmatprep.subr.mxu0 0.0
    %547 = vmatpush2.msra.mxu0 0.0
    %548 = vmatprep.subr.mxu0 0.0
    %549 = vmatpush2.msra.mxu0 0.0
    %550 = vmatprep.subr.mxu0 0.0
    %551 = vmatpush2.msra.mxu0 0.0
    %552 = vmatprep.mubr.f32.mxu0 0.0
    %553 = vmatmul.mubr.f32.gmra.mxu0 %v416
    %v554 = vpop.f32.mrf.mxu0
    %v555 = vadd.f32 0.0, %v554
    %v556 = vpop.f32.mrf.mxu0
    %v557 = vadd.f32 0.0, %v556
    %558 = vdwg.mxu0
    %v563 = vrot.slane %v484, 7
    %v564 = vrot.slane %v486, 7
    %v565 = vrot.slane %v555, 7
    %v566 = vrot.slane %v557, 7
    %v571 = vadd.f32 %v181, %v563
    %v572 = vadd.f32 %v183, %v564
    %v573 = vadd.f32 %v252, %v565
    %v574 = vadd.f32 %v254, %v566
    %v575 = vtanh.pop %v571
    %v576 = vtanh.pop %v572
    %v577 = vtanh.pop %v573
    %v578 = vtanh.pop %v574
    %v579 = vmul.f32 %v575, 0.5
    %v580 = vadd.f32 %v579, 0.5
    %v581 = vmul.f32 %v576, 0.5
    %v582 = vadd.f32 %v581, 0.5
    %v583 = vmul.f32 %v578, 0.5
    %v584 = vadd.f32 %v583, 0.5
    %v586 = vrot.slane %v414, 7
    %v588 = vmul.f32 %v582, %v586
    %v589 = vmul.f32 %v580, %v577
    %v590 = vadd.f32 %v588, %v589
    %v591 = vtanh.pop %v590
    %v592 = vmul.f32 %v584, %v591
    %v594 = vrot.slane %v592, 1
    %596 = vmatprep.subr.mxu0 %v86
    %597 = vmatpush1.msra.mxu0 %v85
    %598 = vmatprep.subr.mxu0 %v82
    %599 = vmatpush1.msra.mxu0 %v81
    %600 = vmatprep.subr.mxu0 %v78
    %601 = vmatpush1.msra.mxu0 %v77
    %602 = vmatprep.subr.mxu0 %v74
    %603 = vmatpush1.msra.mxu0 %v73
    %604 = vmatprep.subr.mxu0 %v70
    %605 = vmatpush1.msra.mxu0 %v69
    %606 = vmatprep.subr.mxu0 %v66
    %607 = vmatpush1.msra.mxu0 %v65
    %608 = vmatprep.subr.mxu0 %v62
    %609 = vmatpush1.msra.mxu0 %v61
    %610 = vmatprep.subr.mxu0 %v58
    %611 = vmatpush1.msra.mxu0 %v57
    %612 = vmatprep.subr.mxu0 %v54
    %613 = vmatpush1.msra.mxu0 %v53
    %614 = vmatprep.subr.mxu0 %v50
    %615 = vmatpush1.msra.mxu0 %v49
    %616 = vmatprep.subr.mxu0 %v46
    %617 = vmatpush1.msra.mxu0 %v45
    %618 = vmatprep.subr.mxu0 %v42
    %619 = vmatpush1.msra.mxu0 %v41
    %620 = vmatprep.subr.mxu0 %v38
    %621 = vmatpush1.msra.mxu0 %v37
    %622 = vmatprep.subr.mxu0 %v34
    %623 = vmatpush1.msra.mxu0 %v33
    %624 = vmatprep.subr.mxu0 %v30
    %625 = vmatpush1.msra.mxu0 %v29
    %626 = vmatprep.subr.mxu0 %v26
    %627 = vmatpush1.msra.mxu0 %v25
    %628 = vmatprep.subr.mxu0 0.0
    %629 = vmatpush2.msra.mxu0 0.0
    %630 = vmatprep.subr.mxu0 0.0
    %631 = vmatpush2.msra.mxu0 0.0
    %632 = vmatprep.subr.mxu0 0.0
    %633 = vmatpush2.msra.mxu0 0.0
    %634 = vmatprep.subr.mxu0 0.0
    %635 = vmatpush2.msra.mxu0 0.0
    %636 = vmatprep.subr.mxu0 0.0
    %637 = vmatpush2.msra.mxu0 0.0
    %638 = vmatprep.subr.mxu0 0.0
    %639 = vmatpush2.msra.mxu0 0.0
    %640 = vmatprep.subr.mxu0 0.0
    %641 = vmatpush2.msra.mxu0 0.0
    %642 = vmatprep.subr.mxu0 0.0
    %643 = vmatpush2.msra.mxu0 0.0
    %644 = vmatprep.subr.mxu0 0.0
    %645 = vmatpush2.msra.mxu0 0.0
    %646 = vmatprep.subr.mxu0 0.0
    %647 = vmatpush2.msra.mxu0 0.0
    %648 = vmatprep.subr.mxu0 0.0
    %649 = vmatpush2.msra.mxu0 0.0
    %650 = vmatprep.subr.mxu0 0.0
    %651 = vmatpush2.msra.mxu0 0.0
    %652 = vmatprep.subr.mxu0 0.0
    %653 = vmatpush2.msra.mxu0 0.0
    %654 = vmatprep.subr.mxu0 0.0
    %655 = vmatpush2.msra.mxu0 0.0
    %656 = vmatprep.subr.mxu0 0.0
    %657 = vmatpush2.msra.mxu0 0.0
    %658 = vmatprep.subr.mxu0 0.0
    %659 = vmatpush2.msra.mxu0 0.0
    %660 = vmatprep.mubr.f32.mxu0 0.0
    %661 = vmatmul.mubr.f32.gmra.mxu0 %v594
    %v662 = vpop.f32.mrf.mxu0
    %v663 = vadd.f32 0.0, %v662
    %v664 = vpop.f32.mrf.mxu0
    %v665 = vadd.f32 0.0, %v664
    %666 = vdwg.mxu0
    %667 = vmatprep.subr.mxu0 %v88
    %668 = vmatpush1.msra.mxu0 %v87
    %669 = vmatprep.subr.mxu0 %v84
    %670 = vmatpush1.msra.mxu0 %v83
    %671 = vmatprep.subr.mxu0 %v80
    %672 = vmatpush1.msra.mxu0 %v79
    %673 = vmatprep.subr.mxu0 %v76
    %674 = vmatpush1.msra.mxu0 %v75
    %675 = vmatprep.subr.mxu0 %v72
    %676 = vmatpush1.msra.mxu0 %v71
    %677 = vmatprep.subr.mxu0 %v68
    %678 = vmatpush1.msra.mxu0 %v67
    %679 = vmatprep.subr.mxu0 %v64
    %680 = vmatpush1.msra.mxu0 %v63
    %681 = vmatprep.subr.mxu0 %v60
    %682 = vmatpush1.msra.mxu0 %v59
    %683 = vmatprep.subr.mxu0 %v56
    %684 = vmatpush1.msra.mxu0 %v55
    %685 = vmatprep.subr.mxu0 %v52
    %686 = vmatpush1.msra.mxu0 %v51
    %687 = vmatprep.subr.mxu0 %v48
    %688 = vmatpush1.msra.mxu0 %v47
    %689 = vmatprep.subr.mxu0 %v44
    %690 = vmatpush1.msra.mxu0 %v43
    %691 = vmatprep.subr.mxu0 %v40
    %692 = vmatpush1.msra.mxu0 %v39
    %693 = vmatprep.subr.mxu0 %v36
    %694 = vmatpush1.msra.mxu0 %v35
    %695 = vmatprep.subr.mxu0 %v32
    %696 = vmatpush1.msra.mxu0 %v31
    %697 = vmatprep.subr.mxu0 %v28
    %698 = vmatpush1.msra.mxu0 %v27
    %699 = vmatprep.subr.mxu0 0.0
    %700 = vmatpush2.msra.mxu0 0.0
    %701 = vmatprep.subr.mxu0 0.0
    %702 = vmatpush2.msra.mxu0 0.0
    %703 = vmatprep.subr.mxu0 0.0
    %704 = vmatpush2.msra.mxu0 0.0
    %705 = vmatprep.subr.mxu0 0.0
    %706 = vmatpush2.msra.mxu0 0.0
    %707 = vmatprep.subr.mxu0 0.0
    %708 = vmatpush2.msra.mxu0 0.0
    %709 = vmatprep.subr.mxu0 0.0
    %710 = vmatpush2.msra.mxu0 0.0
    %711 = vmatprep.subr.mxu0 0.0
    %712 = vmatpush2.msra.mxu0 0.0
    %713 = vmatprep.subr.mxu0 0.0
    %714 = vmatpush2.msra.mxu0 0.0
    %715 = vmatprep.subr.mxu0 0.0
    %716 = vmatpush2.msra.mxu0 0.0
    %717 = vmatprep.subr.mxu0 0.0
    %718 = vmatpush2.msra.mxu0 0.0
    %719 = vmatprep.subr.mxu0 0.0
    %720 = vmatpush2.msra.mxu0 0.0
    %721 = vmatprep.subr.mxu0 0.0
    %722 = vmatpush2.msra.mxu0 0.0
    %723 = vmatprep.subr.mxu0 0.0
    %724 = vmatpush2.msra.mxu0 0.0
    %725 = vmatprep.subr.mxu0 0.0
    %726 = vmatpush2.msra.mxu0 0.0
    %727 = vmatprep.subr.mxu0 0.0
    %728 = vmatpush2.msra.mxu0 0.0
    %729 = vmatprep.subr.mxu0 0.0
    %730 = vmatpush2.msra.mxu0 0.0
    %731 = vmatprep.mubr.f32.mxu0 0.0
    %732 = vmatmul.mubr.f32.gmra.mxu0 %v594
    %v733 = vpop.f32.mrf.mxu0
    %v734 = vadd.f32 0.0, %v733
    %v735 = vpop.f32.mrf.mxu0
    %v736 = vadd.f32 0.0, %v735
    %737 = vdwg.mxu0
    %v742 = vrot.slane %v663, 6
    %v743 = vrot.slane %v665, 6
    %v744 = vrot.slane %v734, 6
    %v745 = vrot.slane %v736, 6
    %v750 = vadd.f32 %v181, %v742
    %v751 = vadd.f32 %v183, %v743
    %v752 = vadd.f32 %v252, %v744
    %v753 = vadd.f32 %v254, %v745
    %v754 = vtanh.pop %v750
    %v755 = vtanh.pop %v751
    %v756 = vtanh.pop %v752
    %v757 = vtanh.pop %v753
    %v758 = vmul.f32 %v754, 0.5
    %v759 = vadd.f32 %v758, 0.5
    %v760 = vmul.f32 %v755, 0.5
    %v761 = vadd.f32 %v760, 0.5
    %v762 = vmul.f32 %v757, 0.5
    %v763 = vadd.f32 %v762, 0.5
    %v765 = vrot.slane %v590, 7
    %v767 = vmul.f32 %v761, %v765
    %v768 = vmul.f32 %v759, %v756
    %v769 = vadd.f32 %v767, %v768
    %v770 = vtanh.pop %v769
    %v771 = vmul.f32 %v763, %v770
    %v773 = vrot.slane %v771, 2
    %775 = vmatprep.subr.mxu0 %v86
    %776 = vmatpush1.msra.mxu0 %v85
    %777 = vmatprep.subr.mxu0 %v82
    %778 = vmatpush1.msra.mxu0 %v81
    %779 = vmatprep.subr.mxu0 %v78
    %780 = vmatpush1.msra.mxu0 %v77
    %781 = vmatprep.subr.mxu0 %v74
    %782 = vmatpush1.msra.mxu0 %v73
    %783 = vmatprep.subr.mxu0 %v70
    %784 = vmatpush1.msra.mxu0 %v69
    %785 = vmatprep.subr.mxu0 %v66
    %786 = vmatpush1.msra.mxu0 %v65
    %787 = vmatprep.subr.mxu0 %v62
    %788 = vmatpush1.msra.mxu0 %v61
    %789 = vmatprep.subr.mxu0 %v58
    %790 = vmatpush1.msra.mxu0 %v57
    %791 = vmatprep.subr.mxu0 %v54
    %792 = vmatpush1.msra.mxu0 %v53
    %793 = vmatprep.subr.mxu0 %v50
    %794 = vmatpush1.msra.mxu0 %v49
    %795 = vmatprep.subr.mxu0 %v46
    %796 = vmatpush1.msra.mxu0 %v45
    %797 = vmatprep.subr.mxu0 %v42
    %798 = vmatpush1.msra.mxu0 %v41
    %799 = vmatprep.subr.mxu0 %v38
    %800 = vmatpush1.msra.mxu0 %v37
    %801 = vmatprep.subr.mxu0 %v34
    %802 = vmatpush1.msra.mxu0 %v33
    %803 = vmatprep.subr.mxu0 %v30
    %804 = vmatpush1.msra.mxu0 %v29
    %805 = vmatprep.subr.mxu0 %v26
    %806 = vmatpush1.msra.mxu0 %v25
    %807 = vmatprep.subr.mxu0 0.0
    %808 = vmatpush2.msra.mxu0 0.0
    %809 = vmatprep.subr.mxu0 0.0
    %810 = vmatpush2.msra.mxu0 0.0
    %811 = vmatprep.subr.mxu0 0.0
    %812 = vmatpush2.msra.mxu0 0.0
    %813 = vmatprep.subr.mxu0 0.0
    %814 = vmatpush2.msra.mxu0 0.0
    %815 = vmatprep.subr.mxu0 0.0
    %816 = vmatpush2.msra.mxu0 0.0
    %817 = vmatprep.subr.mxu0 0.0
    %818 = vmatpush2.msra.mxu0 0.0
    %819 = vmatprep.subr.mxu0 0.0
    %820 = vmatpush2.msra.mxu0 0.0
    %821 = vmatprep.subr.mxu0 0.0
    %822 = vmatpush2.msra.mxu0 0.0
    %823 = vmatprep.subr.mxu0 0.0
    %824 = vmatpush2.msra.mxu0 0.0
    %825 = vmatprep.subr.mxu0 0.0
    %826 = vmatpush2.msra.mxu0 0.0
    %827 = vmatprep.subr.mxu0 0.0
    %828 = vmatpush2.msra.mxu0 0.0
    %829 = vmatprep.subr.mxu0 0.0
    %830 = vmatpush2.msra.mxu0 0.0
    %831 = vmatprep.subr.mxu0 0.0
    %832 = vmatpush2.msra.mxu0 0.0
    %833 = vmatprep.subr.mxu0 0.0
    %834 = vmatpush2.msra.mxu0 0.0
    %835 = vmatprep.subr.mxu0 0.0
    %836 = vmatpush2.msra.mxu0 0.0
    %837 = vmatprep.subr.mxu0 0.0
    %838 = vmatpush2.msra.mxu0 0.0
    %839 = vmatprep.mubr.f32.mxu0 0.0
    %840 = vmatmul.mubr.f32.gmra.mxu0 %v773
    %v841 = vpop.f32.mrf.mxu0
    %v842 = vadd.f32 0.0, %v841
    %v843 = vpop.f32.mrf.mxu0
    %v844 = vadd.f32 0.0, %v843
    %845 = vdwg.mxu0
    %846 = vmatprep.subr.mxu0 %v88
    %847 = vmatpush1.msra.mxu0 %v87
    %848 = vmatprep.subr.mxu0 %v84
    %849 = vmatpush1.msra.mxu0 %v83
    %850 = vmatprep.subr.mxu0 %v80
    %851 = vmatpush1.msra.mxu0 %v79
    %852 = vmatprep.subr.mxu0 %v76
    %853 = vmatpush1.msra.mxu0 %v75
    %854 = vmatprep.subr.mxu0 %v72
    %855 = vmatpush1.msra.mxu0 %v71
    %856 = vmatprep.subr.mxu0 %v68
    %857 = vmatpush1.msra.mxu0 %v67
    %858 = vmatprep.subr.mxu0 %v64
    %859 = vmatpush1.msra.mxu0 %v63
    %860 = vmatprep.subr.mxu0 %v60
    %861 = vmatpush1.msra.mxu0 %v59
    %862 = vmatprep.subr.mxu0 %v56
    %863 = vmatpush1.msra.mxu0 %v55
    %864 = vmatprep.subr.mxu0 %v52
    %865 = vmatpush1.msra.mxu0 %v51
    %866 = vmatprep.subr.mxu0 %v48
    %867 = vmatpush1.msra.mxu0 %v47
    %868 = vmatprep.subr.mxu0 %v44
    %869 = vmatpush1.msra.mxu0 %v43
    %870 = vmatprep.subr.mxu0 %v40
    %871 = vmatpush1.msra.mxu0 %v39
    %872 = vmatprep.subr.mxu0 %v36
    %873 = vmatpush1.msra.mxu0 %v35
    %874 = vmatprep.subr.mxu0 %v32
    %875 = vmatpush1.msra.mxu0 %v31
    %876 = vmatprep.subr.mxu0 %v28
    %877 = vmatpush1.msra.mxu0 %v27
    %878 = vmatprep.subr.mxu0 0.0
    %879 = vmatpush2.msra.mxu0 0.0
    %880 = vmatprep.subr.mxu0 0.0
    %881 = vmatpush2.msra.mxu0 0.0
    %882 = vmatprep.subr.mxu0 0.0
    %883 = vmatpush2.msra.mxu0 0.0
    %884 = vmatprep.subr.mxu0 0.0
    %885 = vmatpush2.msra.mxu0 0.0
    %886 = vmatprep.subr.mxu0 0.0
    %887 = vmatpush2.msra.mxu0 0.0
    %888 = vmatprep.subr.mxu0 0.0
    %889 = vmatpush2.msra.mxu0 0.0
    %890 = vmatprep.subr.mxu0 0.0
    %891 = vmatpush2.msra.mxu0 0.0
    %892 = vmatprep.subr.mxu0 0.0
    %893 = vmatpush2.msra.mxu0 0.0
    %894 = vmatprep.subr.mxu0 0.0
    %895 = vmatpush2.msra.mxu0 0.0
    %896 = vmatprep.subr.mxu0 0.0
    %897 = vmatpush2.msra.mxu0 0.0
    %898 = vmatprep.subr.mxu0 0.0
    %899 = vmatpush2.msra.mxu0 0.0
    %900 = vmatprep.subr.mxu0 0.0
    %901 = vmatpush2.msra.mxu0 0.0
    %902 = vmatprep.subr.mxu0 0.0
    %903 = vmatpush2.msra.mxu0 0.0
    %904 = vmatprep.subr.mxu0 0.0
    %905 = vmatpush2.msra.mxu0 0.0
    %906 = vmatprep.subr.mxu0 0.0
    %907 = vmatpush2.msra.mxu0 0.0
    %908 = vmatprep.subr.mxu0 0.0
    %909 = vmatpush2.msra.mxu0 0.0
    %910 = vmatprep.mubr.f32.mxu0 0.0
    %911 = vmatmul.mubr.f32.gmra.mxu0 %v773
    %v912 = vpop.f32.mrf.mxu0
    %v913 = vadd.f32 0.0, %v912
    %v914 = vpop.f32.mrf.mxu0
    %v915 = vadd.f32 0.0, %v914
    %916 = vdwg.mxu0
    %v921 = vrot.slane %v842, 5
    %v922 = vrot.slane %v844, 5
    %v923 = vrot.slane %v913, 5
    %v924 = vrot.slane %v915, 5
    %v929 = vadd.f32 %v181, %v921
    %v930 = vadd.f32 %v183, %v922
    %v931 = vadd.f32 %v252, %v923
    %v932 = vadd.f32 %v254, %v924
    %v933 = vtanh.pop %v929
    %v934 = vtanh.pop %v930
    %v935 = vtanh.pop %v931
    %v936 = vtanh.pop %v932
    %v937 = vmul.f32 %v933, 0.5
    %v938 = vadd.f32 %v937, 0.5
    %v939 = vmul.f32 %v934, 0.5
    %v940 = vadd.f32 %v939, 0.5
    %v941 = vmul.f32 %v936, 0.5
    %v942 = vadd.f32 %v941, 0.5
    %v944 = vrot.slane %v769, 7
    %v946 = vmul.f32 %v940, %v944
    %v947 = vmul.f32 %v938, %v935
    %v948 = vadd.f32 %v946, %v947
    %v949 = vtanh.pop %v948
    %v950 = vmul.f32 %v942, %v949
    %v952 = vrot.slane %v950, 3
    %954 = vmatprep.subr.mxu0 %v86
    %955 = vmatpush1.msra.mxu0 %v85
    %956 = vmatprep.subr.mxu0 %v82
    %957 = vmatpush1.msra.mxu0 %v81
    %958 = vmatprep.subr.mxu0 %v78
    %959 = vmatpush1.msra.mxu0 %v77
    %960 = vmatprep.subr.mxu0 %v74
    %961 = vmatpush1.msra.mxu0 %v73
    %962 = vmatprep.subr.mxu0 %v70
    %963 = vmatpush1.msra.mxu0 %v69
    %964 = vmatprep.subr.mxu0 %v66
    %965 = vmatpush1.msra.mxu0 %v65
    %966 = vmatprep.subr.mxu0 %v62
    %967 = vmatpush1.msra.mxu0 %v61
    %968 = vmatprep.subr.mxu0 %v58
    %969 = vmatpush1.msra.mxu0 %v57
    %970 = vmatprep.subr.mxu0 %v54
    %971 = vmatpush1.msra.mxu0 %v53
    %972 = vmatprep.subr.mxu0 %v50
    %973 = vmatpush1.msra.mxu0 %v49
    %974 = vmatprep.subr.mxu0 %v46
    %975 = vmatpush1.msra.mxu0 %v45
    %976 = vmatprep.subr.mxu0 %v42
    %977 = vmatpush1.msra.mxu0 %v41
    %978 = vmatprep.subr.mxu0 %v38
    %979 = vmatpush1.msra.mxu0 %v37
    %980 = vmatprep.subr.mxu0 %v34
    %981 = vmatpush1.msra.mxu0 %v33
    %982 = vmatprep.subr.mxu0 %v30
    %983 = vmatpush1.msra.mxu0 %v29
    %984 = vmatprep.subr.mxu0 %v26
    %985 = vmatpush1.msra.mxu0 %v25
    %986 = vmatprep.subr.mxu0 0.0
    %987 = vmatpush2.msra.mxu0 0.0
    %988 = vmatprep.subr.mxu0 0.0
    %989 = vmatpush2.msra.mxu0 0.0
    %990 = vmatprep.subr.mxu0 0.0
    %991 = vmatpush2.msra.mxu0 0.0
    %992 = vmatprep.subr.mxu0 0.0
    %993 = vmatpush2.msra.mxu0 0.0
    %994 = vmatprep.subr.mxu0 0.0
    %995 = vmatpush2.msra.mxu0 0.0
    %996 = vmatprep.subr.mxu0 0.0
    %997 = vmatpush2.msra.mxu0 0.0
    %998 = vmatprep.subr.mxu0 0.0
    %999 = vmatpush2.msra.mxu0 0.0
    %1000 = vmatprep.subr.mxu0 0.0
    %1001 = vmatpush2.msra.mxu0 0.0
    %1002 = vmatprep.subr.mxu0 0.0
    %1003 = vmatpush2.msra.mxu0 0.0
    %1004 = vmatprep.subr.mxu0 0.0
    %1005 = vmatpush2.msra.mxu0 0.0
    %1006 = vmatprep.subr.mxu0 0.0
    %1007 = vmatpush2.msra.mxu0 0.0
    %1008 = vmatprep.subr.mxu0 0.0
    %1009 = vmatpush2.msra.mxu0 0.0
    %1010 = vmatprep.subr.mxu0 0.0
    %1011 = vmatpush2.msra.mxu0 0.0
    %1012 = vmatprep.subr.mxu0 0.0
    %1013 = vmatpush2.msra.mxu0 0.0
    %1014 = vmatprep.subr.mxu0 0.0
    %1015 = vmatpush2.msra.mxu0 0.0
    %1016 = vmatprep.subr.mxu0 0.0
    %1017 = vmatpush2.msra.mxu0 0.0
    %1018 = vmatprep.mubr.f32.mxu0 0.0
    %1019 = vmatmul.mubr.f32.gmra.mxu0 %v952
    %v1020 = vpop.f32.mrf.mxu0
    %v1021 = vadd.f32 0.0, %v1020
    %v1022 = vpop.f32.mrf.mxu0
    %v1023 = vadd.f32 0.0, %v1022
    %1024 = vdwg.mxu0
    %1025 = vmatprep.subr.mxu0 %v88
    %1026 = vmatpush1.msra.mxu0 %v87
    %1027 = vmatprep.subr.mxu0 %v84
    %1028 = vmatpush1.msra.mxu0 %v83
    %1029 = vmatprep.subr.mxu0 %v80
    %1030 = vmatpush1.msra.mxu0 %v79
    %1031 = vmatprep.subr.mxu0 %v76
    %1032 = vmatpush1.msra.mxu0 %v75
    %1033 = vmatprep.subr.mxu0 %v72
    %1034 = vmatpush1.msra.mxu0 %v71
    %1035 = vmatprep.subr.mxu0 %v68
    %1036 = vmatpush1.msra.mxu0 %v67
    %1037 = vmatprep.subr.mxu0 %v64
    %1038 = vmatpush1.msra.mxu0 %v63
    %1039 = vmatprep.subr.mxu0 %v60
    %1040 = vmatpush1.msra.mxu0 %v59
    %1041 = vmatprep.subr.mxu0 %v56
    %1042 = vmatpush1.msra.mxu0 %v55
    %1043 = vmatprep.subr.mxu0 %v52
    %1044 = vmatpush1.msra.mxu0 %v51
    %1045 = vmatprep.subr.mxu0 %v48
    %1046 = vmatpush1.msra.mxu0 %v47
    %1047 = vmatprep.subr.mxu0 %v44
    %1048 = vmatpush1.msra.mxu0 %v43
    %1049 = vmatprep.subr.mxu0 %v40
    %1050 = vmatpush1.msra.mxu0 %v39
    %1051 = vmatprep.subr.mxu0 %v36
    %1052 = vmatpush1.msra.mxu0 %v35
    %1053 = vmatprep.subr.mxu0 %v32
    %1054 = vmatpush1.msra.mxu0 %v31
    %1055 = vmatprep.subr.mxu0 %v28
    %1056 = vmatpush1.msra.mxu0 %v27
    %1057 = vmatprep.subr.mxu0 0.0
    %1058 = vmatpush2.msra.mxu0 0.0
    %1059 = vmatprep.subr.mxu0 0.0
    %1060 = vmatpush2.msra.mxu0 0.0
    %1061 = vmatprep.subr.mxu0 0.0
    %1062 = vmatpush2.msra.mxu0 0.0
    %1063 = vmatprep.subr.mxu0 0.0
    %1064 = vmatpush2.msra.mxu0 0.0
    %1065 = vmatprep.subr.mxu0 0.0
    %1066 = vmatpush2.msra.mxu0 0.0
    %1067 = vmatprep.subr.mxu0 0.0
    %1068 = vmatpush2.msra.mxu0 0.0
    %1069 = vmatprep.subr.mxu0 0.0
    %1070 = vmatpush2.msra.mxu0 0.0
    %1071 = vmatprep.subr.mxu0 0.0
    %1072 = vmatpush2.msra.mxu0 0.0
    %1073 = vmatprep.subr.mxu0 0.0
    %1074 = vmatpush2.msra.mxu0 0.0
    %1075 = vmatprep.subr.mxu0 0.0
    %1076 = vmatpush2.msra.mxu0 0.0
    %1077 = vmatprep.subr.mxu0 0.0
    %1078 = vmatpush2.msra.mxu0 0.0
    %1079 = vmatprep.subr.mxu0 0.0
    %1080 = vmatpush2.msra.mxu0 0.0
    %1081 = vmatprep.subr.mxu0 0.0
    %1082 = vmatpush2.msra.mxu0 0.0
    %1083 = vmatprep.subr.mxu0 0.0
    %1084 = vmatpush2.msra.mxu0 0.0
    %1085 = vmatprep.subr.mxu0 0.0
    %1086 = vmatpush2.msra.mxu0 0.0
    %1087 = vmatprep.subr.mxu0 0.0
    %1088 = vmatpush2.msra.mxu0 0.0
    %1089 = vmatprep.mubr.f32.mxu0 0.0
    %1090 = vmatmul.mubr.f32.gmra.mxu0 %v952
    %v1091 = vpop.f32.mrf.mxu0
    %v1092 = vadd.f32 0.0, %v1091
    %v1093 = vpop.f32.mrf.mxu0
    %v1094 = vadd.f32 0.0, %v1093
    %1095 = vdwg.mxu0
    %v1100 = vrot.slane %v1021, 4
    %v1101 = vrot.slane %v1023, 4
    %v1102 = vrot.slane %v1092, 4
    %v1103 = vrot.slane %v1094, 4
    %v1108 = vadd.f32 %v181, %v1100
    %v1109 = vadd.f32 %v183, %v1101
    %v1110 = vadd.f32 %v252, %v1102
    %v1111 = vadd.f32 %v254, %v1103
    %v1112 = vtanh.pop %v1108
    %v1113 = vtanh.pop %v1109
    %v1114 = vtanh.pop %v1110
    %v1115 = vtanh.pop %v1111
    %v1116 = vmul.f32 %v1112, 0.5
    %v1117 = vadd.f32 %v1116, 0.5
    %v1118 = vmul.f32 %v1113, 0.5
    %v1119 = vadd.f32 %v1118, 0.5
    %v1120 = vmul.f32 %v1115, 0.5
    %v1121 = vadd.f32 %v1120, 0.5
    %v1123 = vrot.slane %v948, 7
    %v1125 = vmul.f32 %v1119, %v1123
    %v1126 = vmul.f32 %v1117, %v1114
    %v1127 = vadd.f32 %v1125, %v1126
    %v1128 = vtanh.pop %v1127
    %v1129 = vmul.f32 %v1121, %v1128
    %v1131 = vrot.slane %v1129, 4
    %1133 = vmatprep.subr.mxu0 %v86
    %1134 = vmatpush1.msra.mxu0 %v85
    %1135 = vmatprep.subr.mxu0 %v82
    %1136 = vmatpush1.msra.mxu0 %v81
    %1137 = vmatprep.subr.mxu0 %v78
    %1138 = vmatpush1.msra.mxu0 %v77
    %1139 = vmatprep.subr.mxu0 %v74
    %1140 = vmatpush1.msra.mxu0 %v73
    %1141 = vmatprep.subr.mxu0 %v70
    %1142 = vmatpush1.msra.mxu0 %v69
    %1143 = vmatprep.subr.mxu0 %v66
    %1144 = vmatpush1.msra.mxu0 %v65
    %1145 = vmatprep.subr.mxu0 %v62
    %1146 = vmatpush1.msra.mxu0 %v61
    %1147 = vmatprep.subr.mxu0 %v58
    %1148 = vmatpush1.msra.mxu0 %v57
    %1149 = vmatprep.subr.mxu0 %v54
    %1150 = vmatpush1.msra.mxu0 %v53
    %1151 = vmatprep.subr.mxu0 %v50
    %1152 = vmatpush1.msra.mxu0 %v49
    %1153 = vmatprep.subr.mxu0 %v46
    %1154 = vmatpush1.msra.mxu0 %v45
    %1155 = vmatprep.subr.mxu0 %v42
    %1156 = vmatpush1.msra.mxu0 %v41
    %1157 = vmatprep.subr.mxu0 %v38
    %1158 = vmatpush1.msra.mxu0 %v37
    %1159 = vmatprep.subr.mxu0 %v34
    %1160 = vmatpush1.msra.mxu0 %v33
    %1161 = vmatprep.subr.mxu0 %v30
    %1162 = vmatpush1.msra.mxu0 %v29
    %1163 = vmatprep.subr.mxu0 %v26
    %1164 = vmatpush1.msra.mxu0 %v25
    %1165 = vmatprep.subr.mxu0 0.0
    %1166 = vmatpush2.msra.mxu0 0.0
    %1167 = vmatprep.subr.mxu0 0.0
    %1168 = vmatpush2.msra.mxu0 0.0
    %1169 = vmatprep.subr.mxu0 0.0
    %1170 = vmatpush2.msra.mxu0 0.0
    %1171 = vmatprep.subr.mxu0 0.0
    %1172 = vmatpush2.msra.mxu0 0.0
    %1173 = vmatprep.subr.mxu0 0.0
    %1174 = vmatpush2.msra.mxu0 0.0
    %1175 = vmatprep.subr.mxu0 0.0
    %1176 = vmatpush2.msra.mxu0 0.0
    %1177 = vmatprep.subr.mxu0 0.0
    %1178 = vmatpush2.msra.mxu0 0.0
    %1179 = vmatprep.subr.mxu0 0.0
    %1180 = vmatpush2.msra.mxu0 0.0
    %1181 = vmatprep.subr.mxu0 0.0
    %1182 = vmatpush2.msra.mxu0 0.0
    %1183 = vmatprep.subr.mxu0 0.0
    %1184 = vmatpush2.msra.mxu0 0.0
    %1185 = vmatprep.subr.mxu0 0.0
    %1186 = vmatpush2.msra.mxu0 0.0
    %1187 = vmatprep.subr.mxu0 0.0
    %1188 = vmatpush2.msra.mxu0 0.0
    %1189 = vmatprep.subr.mxu0 0.0
    %1190 = vmatpush2.msra.mxu0 0.0
    %1191 = vmatprep.subr.mxu0 0.0
    %1192 = vmatpush2.msra.mxu0 0.0
    %1193 = vmatprep.subr.mxu0 0.0
    %1194 = vmatpush2.msra.mxu0 0.0
    %1195 = vmatprep.subr.mxu0 0.0
    %1196 = vmatpush2.msra.mxu0 0.0
    %1197 = vmatprep.mubr.f32.mxu0 0.0
    %1198 = vmatmul.mubr.f32.gmra.mxu0 %v1131
    %v1199 = vpop.f32.mrf.mxu0
    %v1200 = vadd.f32 0.0, %v1199
    %v1201 = vpop.f32.mrf.mxu0
    %v1202 = vadd.f32 0.0, %v1201
    %1203 = vdwg.mxu0
    %1204 = vmatprep.subr.mxu0 %v88
    %1205 = vmatpush1.msra.mxu0 %v87
    %1206 = vmatprep.subr.mxu0 %v84
    %1207 = vmatpush1.msra.mxu0 %v83
    %1208 = vmatprep.subr.mxu0 %v80
    %1209 = vmatpush1.msra.mxu0 %v79
    %1210 = vmatprep.subr.mxu0 %v76
    %1211 = vmatpush1.msra.mxu0 %v75
    %1212 = vmatprep.subr.mxu0 %v72
    %1213 = vmatpush1.msra.mxu0 %v71
    %1214 = vmatprep.subr.mxu0 %v68
    %1215 = vmatpush1.msra.mxu0 %v67
    %1216 = vmatprep.subr.mxu0 %v64
    %1217 = vmatpush1.msra.mxu0 %v63
    %1218 = vmatprep.subr.mxu0 %v60
    %1219 = vmatpush1.msra.mxu0 %v59
    %1220 = vmatprep.subr.mxu0 %v56
    %1221 = vmatpush1.msra.mxu0 %v55
    %1222 = vmatprep.subr.mxu0 %v52
    %1223 = vmatpush1.msra.mxu0 %v51
    %1224 = vmatprep.subr.mxu0 %v48
    %1225 = vmatpush1.msra.mxu0 %v47
    %1226 = vmatprep.subr.mxu0 %v44
    %1227 = vmatpush1.msra.mxu0 %v43
    %1228 = vmatprep.subr.mxu0 %v40
    %1229 = vmatpush1.msra.mxu0 %v39
    %1230 = vmatprep.subr.mxu0 %v36
    %1231 = vmatpush1.msra.mxu0 %v35
    %1232 = vmatprep.subr.mxu0 %v32
    %1233 = vmatpush1.msra.mxu0 %v31
    %1234 = vmatprep.subr.mxu0 %v28
    %1235 = vmatpush1.msra.mxu0 %v27
    %1236 = vmatprep.subr.mxu0 0.0
    %1237 = vmatpush2.msra.mxu0 0.0
    %1238 = vmatprep.subr.mxu0 0.0
    %1239 = vmatpush2.msra.mxu0 0.0
    %1240 = vmatprep.subr.mxu0 0.0
    %1241 = vmatpush2.msra.mxu0 0.0
    %1242 = vmatprep.subr.mxu0 0.0
    %1243 = vmatpush2.msra.mxu0 0.0
    %1244 = vmatprep.subr.mxu0 0.0
    %1245 = vmatpush2.msra.mxu0 0.0
    %1246 = vmatprep.subr.mxu0 0.0
    %1247 = vmatpush2.msra.mxu0 0.0
    %1248 = vmatprep.subr.mxu0 0.0
    %1249 = vmatpush2.msra.mxu0 0.0
    %1250 = vmatprep.subr.mxu0 0.0
    %1251 = vmatpush2.msra.mxu0 0.0
    %1252 = vmatprep.subr.mxu0 0.0
    %1253 = vmatpush2.msra.mxu0 0.0
    %1254 = vmatprep.subr.mxu0 0.0
    %1255 = vmatpush2.msra.mxu0 0.0
    %1256 = vmatprep.subr.mxu0 0.0
    %1257 = vmatpush2.msra.mxu0 0.0
    %1258 = vmatprep.subr.mxu0 0.0
    %1259 = vmatpush2.msra.mxu0 0.0
    %1260 = vmatprep.subr.mxu0 0.0
    %1261 = vmatpush2.msra.mxu0 0.0
    %1262 = vmatprep.subr.mxu0 0.0
    %1263 = vmatpush2.msra.mxu0 0.0
    %1264 = vmatprep.subr.mxu0 0.0
    %1265 = vmatpush2.msra.mxu0 0.0
    %1266 = vmatprep.subr.mxu0 0.0
    %1267 = vmatpush2.msra.mxu0 0.0
    %1268 = vmatprep.mubr.f32.mxu0 0.0
    %1269 = vmatmul.mubr.f32.gmra.mxu0 %v1131
    %v1270 = vpop.f32.mrf.mxu0
    %v1271 = vadd.f32 0.0, %v1270
    %v1272 = vpop.f32.mrf.mxu0
    %v1273 = vadd.f32 0.0, %v1272
    %1274 = vdwg.mxu0
    %v1279 = vrot.slane %v1200, 3
    %v1280 = vrot.slane %v1202, 3
    %v1281 = vrot.slane %v1271, 3
    %v1282 = vrot.slane %v1273, 3
    %v1287 = vadd.f32 %v181, %v1279
    %v1288 = vadd.f32 %v183, %v1280
    %v1289 = vadd.f32 %v252, %v1281
    %v1290 = vadd.f32 %v254, %v1282
    %v1291 = vtanh.pop %v1287
    %v1292 = vtanh.pop %v1288
    %v1293 = vtanh.pop %v1289
    %v1294 = vtanh.pop %v1290
    %v1295 = vmul.f32 %v1291, 0.5
    %v1296 = vadd.f32 %v1295, 0.5
    %v1297 = vmul.f32 %v1292, 0.5
    %v1298 = vadd.f32 %v1297, 0.5
    %v1299 = vmul.f32 %v1294, 0.5
    %v1300 = vadd.f32 %v1299, 0.5
    %v1302 = vrot.slane %v1127, 7
    %v1304 = vmul.f32 %v1298, %v1302
    %v1305 = vmul.f32 %v1296, %v1293
    %v1306 = vadd.f32 %v1304, %v1305
    %v1307 = vtanh.pop %v1306
    %v1308 = vmul.f32 %v1300, %v1307
    %v1310 = vrot.slane %v1308, 5
    %1312 = vmatprep.subr.mxu0 %v86
    %1313 = vmatpush1.msra.mxu0 %v85
    %1314 = vmatprep.subr.mxu0 %v82
    %1315 = vmatpush1.msra.mxu0 %v81
    %1316 = vmatprep.subr.mxu0 %v78
    %1317 = vmatpush1.msra.mxu0 %v77
    %1318 = vmatprep.subr.mxu0 %v74
    %1319 = vmatpush1.msra.mxu0 %v73
    %1320 = vmatprep.subr.mxu0 %v70
    %1321 = vmatpush1.msra.mxu0 %v69
    %1322 = vmatprep.subr.mxu0 %v66
    %1323 = vmatpush1.msra.mxu0 %v65
    %1324 = vmatprep.subr.mxu0 %v62
    %1325 = vmatpush1.msra.mxu0 %v61
    %1326 = vmatprep.subr.mxu0 %v58
    %1327 = vmatpush1.msra.mxu0 %v57
    %1328 = vmatprep.subr.mxu0 %v54
    %1329 = vmatpush1.msra.mxu0 %v53
    %1330 = vmatprep.subr.mxu0 %v50
    %1331 = vmatpush1.msra.mxu0 %v49
    %1332 = vmatprep.subr.mxu0 %v46
    %1333 = vmatpush1.msra.mxu0 %v45
    %1334 = vmatprep.subr.mxu0 %v42
    %1335 = vmatpush1.msra.mxu0 %v41
    %1336 = vmatprep.subr.mxu0 %v38
    %1337 = vmatpush1.msra.mxu0 %v37
    %1338 = vmatprep.subr.mxu0 %v34
    %1339 = vmatpush1.msra.mxu0 %v33
    %1340 = vmatprep.subr.mxu0 %v30
    %1341 = vmatpush1.msra.mxu0 %v29
    %1342 = vmatprep.subr.mxu0 %v26
    %1343 = vmatpush1.msra.mxu0 %v25
    %1344 = vmatprep.subr.mxu0 0.0
    %1345 = vmatpush2.msra.mxu0 0.0
    %1346 = vmatprep.subr.mxu0 0.0
    %1347 = vmatpush2.msra.mxu0 0.0
    %1348 = vmatprep.subr.mxu0 0.0
    %1349 = vmatpush2.msra.mxu0 0.0
    %1350 = vmatprep.subr.mxu0 0.0
    %1351 = vmatpush2.msra.mxu0 0.0
    %1352 = vmatprep.subr.mxu0 0.0
    %1353 = vmatpush2.msra.mxu0 0.0
    %1354 = vmatprep.subr.mxu0 0.0
    %1355 = vmatpush2.msra.mxu0 0.0
    %1356 = vmatprep.subr.mxu0 0.0
    %1357 = vmatpush2.msra.mxu0 0.0
    %1358 = vmatprep.subr.mxu0 0.0
    %1359 = vmatpush2.msra.mxu0 0.0
    %1360 = vmatprep.subr.mxu0 0.0
    %1361 = vmatpush2.msra.mxu0 0.0
    %1362 = vmatprep.subr.mxu0 0.0
    %1363 = vmatpush2.msra.mxu0 0.0
    %1364 = vmatprep.subr.mxu0 0.0
    %1365 = vmatpush2.msra.mxu0 0.0
    %1366 = vmatprep.subr.mxu0 0.0
    %1367 = vmatpush2.msra.mxu0 0.0
    %1368 = vmatprep.subr.mxu0 0.0
    %1369 = vmatpush2.msra.mxu0 0.0
    %1370 = vmatprep.subr.mxu0 0.0
    %1371 = vmatpush2.msra.mxu0 0.0
    %1372 = vmatprep.subr.mxu0 0.0
    %1373 = vmatpush2.msra.mxu0 0.0
    %1374 = vmatprep.subr.mxu0 0.0
    %1375 = vmatpush2.msra.mxu0 0.0
    %1376 = vmatprep.mubr.f32.mxu0 0.0
    %1377 = vmatmul.mubr.f32.gmra.mxu0 %v1310
    %v1378 = vpop.f32.mrf.mxu0
    %v1379 = vadd.f32 0.0, %v1378
    %v1380 = vpop.f32.mrf.mxu0
    %v1381 = vadd.f32 0.0, %v1380
    %1382 = vdwg.mxu0
    %1383 = vmatprep.subr.mxu0 %v88
    %1384 = vmatpush1.msra.mxu0 %v87
    %1385 = vmatprep.subr.mxu0 %v84
    %1386 = vmatpush1.msra.mxu0 %v83
    %1387 = vmatprep.subr.mxu0 %v80
    %1388 = vmatpush1.msra.mxu0 %v79
    %1389 = vmatprep.subr.mxu0 %v76
    %1390 = vmatpush1.msra.mxu0 %v75
    %1391 = vmatprep.subr.mxu0 %v72
    %1392 = vmatpush1.msra.mxu0 %v71
    %1393 = vmatprep.subr.mxu0 %v68
    %1394 = vmatpush1.msra.mxu0 %v67
    %1395 = vmatprep.subr.mxu0 %v64
    %1396 = vmatpush1.msra.mxu0 %v63
    %1397 = vmatprep.subr.mxu0 %v60
    %1398 = vmatpush1.msra.mxu0 %v59
    %1399 = vmatprep.subr.mxu0 %v56
    %1400 = vmatpush1.msra.mxu0 %v55
    %1401 = vmatprep.subr.mxu0 %v52
    %1402 = vmatpush1.msra.mxu0 %v51
    %1403 = vmatprep.subr.mxu0 %v48
    %1404 = vmatpush1.msra.mxu0 %v47
    %1405 = vmatprep.subr.mxu0 %v44
    %1406 = vmatpush1.msra.mxu0 %v43
    %1407 = vmatprep.subr.mxu0 %v40
    %1408 = vmatpush1.msra.mxu0 %v39
    %1409 = vmatprep.subr.mxu0 %v36
    %1410 = vmatpush1.msra.mxu0 %v35
    %1411 = vmatprep.subr.mxu0 %v32
    %1412 = vmatpush1.msra.mxu0 %v31
    %1413 = vmatprep.subr.mxu0 %v28
    %1414 = vmatpush1.msra.mxu0 %v27
    %1415 = vmatprep.subr.mxu0 0.0
    %1416 = vmatpush2.msra.mxu0 0.0
    %1417 = vmatprep.subr.mxu0 0.0
    %1418 = vmatpush2.msra.mxu0 0.0
    %1419 = vmatprep.subr.mxu0 0.0
    %1420 = vmatpush2.msra.mxu0 0.0
    %1421 = vmatprep.subr.mxu0 0.0
    %1422 = vmatpush2.msra.mxu0 0.0
    %1423 = vmatprep.subr.mxu0 0.0
    %1424 = vmatpush2.msra.mxu0 0.0
    %1425 = vmatprep.subr.mxu0 0.0
    %1426 = vmatpush2.msra.mxu0 0.0
    %1427 = vmatprep.subr.mxu0 0.0
    %1428 = vmatpush2.msra.mxu0 0.0
    %1429 = vmatprep.subr.mxu0 0.0
    %1430 = vmatpush2.msra.mxu0 0.0
    %1431 = vmatprep.subr.mxu0 0.0
    %1432 = vmatpush2.msra.mxu0 0.0
    %1433 = vmatprep.subr.mxu0 0.0
    %1434 = vmatpush2.msra.mxu0 0.0
    %1435 = vmatprep.subr.mxu0 0.0
    %1436 = vmatpush2.msra.mxu0 0.0
    %1437 = vmatprep.subr.mxu0 0.0
    %1438 = vmatpush2.msra.mxu0 0.0
    %1439 = vmatprep.subr.mxu0 0.0
    %1440 = vmatpush2.msra.mxu0 0.0
    %1441 = vmatprep.subr.mxu0 0.0
    %1442 = vmatpush2.msra.mxu0 0.0
    %1443 = vmatprep.subr.mxu0 0.0
    %1444 = vmatpush2.msra.mxu0 0.0
    %1445 = vmatprep.subr.mxu0 0.0
    %1446 = vmatpush2.msra.mxu0 0.0
    %1447 = vmatprep.mubr.f32.mxu0 0.0
    %1448 = vmatmul.mubr.f32.gmra.mxu0 %v1310
    %v1449 = vpop.f32.mrf.mxu0
    %v1450 = vadd.f32 0.0, %v1449
    %v1451 = vpop.f32.mrf.mxu0
    %v1452 = vadd.f32 0.0, %v1451
    %1453 = vdwg.mxu0
    %v1458 = vrot.slane %v1379, 2
    %v1459 = vrot.slane %v1381, 2
    %v1460 = vrot.slane %v1450, 2
    %v1461 = vrot.slane %v1452, 2
    %v1466 = vadd.f32 %v181, %v1458
    %v1467 = vadd.f32 %v183, %v1459
    %v1468 = vadd.f32 %v252, %v1460
    %v1469 = vadd.f32 %v254, %v1461
    %v1470 = vtanh.pop %v1466
    %v1471 = vtanh.pop %v1467
    %v1472 = vtanh.pop %v1468
    %v1473 = vtanh.pop %v1469
    %v1474 = vmul.f32 %v1470, 0.5
    %v1475 = vadd.f32 %v1474, 0.5
    %v1476 = vmul.f32 %v1471, 0.5
    %v1477 = vadd.f32 %v1476, 0.5
    %v1478 = vmul.f32 %v1473, 0.5
    %v1479 = vadd.f32 %v1478, 0.5
    %v1481 = vrot.slane %v1306, 7
    %v1483 = vmul.f32 %v1477, %v1481
    %v1484 = vmul.f32 %v1475, %v1472
    %v1485 = vadd.f32 %v1483, %v1484
    %v1486 = vtanh.pop %v1485
    %v1487 = vmul.f32 %v1479, %v1486
    %v1489 = vrot.slane %v1487, 6
    %1491 = vmatprep.subr.mxu0 %v86
    %1492 = vmatpush1.msra.mxu0 %v85
    %1493 = vmatprep.subr.mxu0 %v82
    %1494 = vmatpush1.msra.mxu0 %v81
    %1495 = vmatprep.subr.mxu0 %v78
    %1496 = vmatpush1.msra.mxu0 %v77
    %1497 = vmatprep.subr.mxu0 %v74
    %1498 = vmatpush1.msra.mxu0 %v73
    %1499 = vmatprep.subr.mxu0 %v70
    %1500 = vmatpush1.msra.mxu0 %v69
    %1501 = vmatprep.subr.mxu0 %v66
    %1502 = vmatpush1.msra.mxu0 %v65
    %1503 = vmatprep.subr.mxu0 %v62
    %1504 = vmatpush1.msra.mxu0 %v61
    %1505 = vmatprep.subr.mxu0 %v58
    %1506 = vmatpush1.msra.mxu0 %v57
    %1507 = vmatprep.subr.mxu0 %v54
    %1508 = vmatpush1.msra.mxu0 %v53
    %1509 = vmatprep.subr.mxu0 %v50
    %1510 = vmatpush1.msra.mxu0 %v49
    %1511 = vmatprep.subr.mxu0 %v46
    %1512 = vmatpush1.msra.mxu0 %v45
    %1513 = vmatprep.subr.mxu0 %v42
    %1514 = vmatpush1.msra.mxu0 %v41
    %1515 = vmatprep.subr.mxu0 %v38
    %1516 = vmatpush1.msra.mxu0 %v37
    %1517 = vmatprep.subr.mxu0 %v34
    %1518 = vmatpush1.msra.mxu0 %v33
    %1519 = vmatprep.subr.mxu0 %v30
    %1520 = vmatpush1.msra.mxu0 %v29
    %1521 = vmatprep.subr.mxu0 %v26
    %1522 = vmatpush1.msra.mxu0 %v25
    %1523 = vmatprep.subr.mxu0 0.0
    %1524 = vmatpush2.msra.mxu0 0.0
    %1525 = vmatprep.subr.mxu0 0.0
    %1526 = vmatpush2.msra.mxu0 0.0
    %1527 = vmatprep.subr.mxu0 0.0
    %1528 = vmatpush2.msra.mxu0 0.0
    %1529 = vmatprep.subr.mxu0 0.0
    %1530 = vmatpush2.msra.mxu0 0.0
    %1531 = vmatprep.subr.mxu0 0.0
    %1532 = vmatpush2.msra.mxu0 0.0
    %1533 = vmatprep.subr.mxu0 0.0
    %1534 = vmatpush2.msra.mxu0 0.0
    %1535 = vmatprep.subr.mxu0 0.0
    %1536 = vmatpush2.msra.mxu0 0.0
    %1537 = vmatprep.subr.mxu0 0.0
    %1538 = vmatpush2.msra.mxu0 0.0
    %1539 = vmatprep.subr.mxu0 0.0
    %1540 = vmatpush2.msra.mxu0 0.0
    %1541 = vmatprep.subr.mxu0 0.0
    %1542 = vmatpush2.msra.mxu0 0.0
    %1543 = vmatprep.subr.mxu0 0.0
    %1544 = vmatpush2.msra.mxu0 0.0
    %1545 = vmatprep.subr.mxu0 0.0
    %1546 = vmatpush2.msra.mxu0 0.0
    %1547 = vmatprep.subr.mxu0 0.0
    %1548 = vmatpush2.msra.mxu0 0.0
    %1549 = vmatprep.subr.mxu0 0.0
    %1550 = vmatpush2.msra.mxu0 0.0
    %1551 = vmatprep.subr.mxu0 0.0
    %1552 = vmatpush2.msra.mxu0 0.0
    %1553 = vmatprep.subr.mxu0 0.0
    %1554 = vmatpush2.msra.mxu0 0.0
    %1555 = vmatprep.mubr.f32.mxu0 0.0
    %1556 = vmatmul.mubr.f32.gmra.mxu0 %v1489
    %v1557 = vpop.f32.mrf.mxu0
    %v1558 = vadd.f32 0.0, %v1557
    %v1559 = vpop.f32.mrf.mxu0
    %v1560 = vadd.f32 0.0, %v1559
    %1561 = vdwg.mxu0
    %1562 = vmatprep.subr.mxu0 %v88
    %1563 = vmatpush1.msra.mxu0 %v87
    %1564 = vmatprep.subr.mxu0 %v84
    %1565 = vmatpush1.msra.mxu0 %v83
    %1566 = vmatprep.subr.mxu0 %v80
    %1567 = vmatpush1.msra.mxu0 %v79
    %1568 = vmatprep.subr.mxu0 %v76
    %1569 = vmatpush1.msra.mxu0 %v75
    %1570 = vmatprep.subr.mxu0 %v72
    %1571 = vmatpush1.msra.mxu0 %v71
    %1572 = vmatprep.subr.mxu0 %v68
    %1573 = vmatpush1.msra.mxu0 %v67
    %1574 = vmatprep.subr.mxu0 %v64
    %1575 = vmatpush1.msra.mxu0 %v63
    %1576 = vmatprep.subr.mxu0 %v60
    %1577 = vmatpush1.msra.mxu0 %v59
    %1578 = vmatprep.subr.mxu0 %v56
    %1579 = vmatpush1.msra.mxu0 %v55
    %1580 = vmatprep.subr.mxu0 %v52
    %1581 = vmatpush1.msra.mxu0 %v51
    %1582 = vmatprep.subr.mxu0 %v48
    %1583 = vmatpush1.msra.mxu0 %v47
    %1584 = vmatprep.subr.mxu0 %v44
    %1585 = vmatpush1.msra.mxu0 %v43
    %1586 = vmatprep.subr.mxu0 %v40
    %1587 = vmatpush1.msra.mxu0 %v39
    %1588 = vmatprep.subr.mxu0 %v36
    %1589 = vmatpush1.msra.mxu0 %v35
    %1590 = vmatprep.subr.mxu0 %v32
    %1591 = vmatpush1.msra.mxu0 %v31
    %1592 = vmatprep.subr.mxu0 %v28
    %1593 = vmatpush1.msra.mxu0 %v27
    %1594 = vmatprep.subr.mxu0 0.0
    %1595 = vmatpush2.msra.mxu0 0.0
    %1596 = vmatprep.subr.mxu0 0.0
    %1597 = vmatpush2.msra.mxu0 0.0
    %1598 = vmatprep.subr.mxu0 0.0
    %1599 = vmatpush2.msra.mxu0 0.0
    %1600 = vmatprep.subr.mxu0 0.0
    %1601 = vmatpush2.msra.mxu0 0.0
    %1602 = vmatprep.subr.mxu0 0.0
    %1603 = vmatpush2.msra.mxu0 0.0
    %1604 = vmatprep.subr.mxu0 0.0
    %1605 = vmatpush2.msra.mxu0 0.0
    %1606 = vmatprep.subr.mxu0 0.0
    %1607 = vmatpush2.msra.mxu0 0.0
    %1608 = vmatprep.subr.mxu0 0.0
    %1609 = vmatpush2.msra.mxu0 0.0
    %1610 = vmatprep.subr.mxu0 0.0
    %1611 = vmatpush2.msra.mxu0 0.0
    %1612 = vmatprep.subr.mxu0 0.0
    %1613 = vmatpush2.msra.mxu0 0.0
    %1614 = vmatprep.subr.mxu0 0.0
    %1615 = vmatpush2.msra.mxu0 0.0
    %1616 = vmatprep.subr.mxu0 0.0
    %1617 = vmatpush2.msra.mxu0 0.0
    %1618 = vmatprep.subr.mxu0 0.0
    %1619 = vmatpush2.msra.mxu0 0.0
    %1620 = vmatprep.subr.mxu0 0.0
    %1621 = vmatpush2.msra.mxu0 0.0
    %1622 = vmatprep.subr.mxu0 0.0
    %1623 = vmatpush2.msra.mxu0 0.0
    %1624 = vmatprep.subr.mxu0 0.0
    %1625 = vmatpush2.msra.mxu0 0.0
    %1626 = vmatprep.mubr.f32.mxu0 0.0
    %1627 = vmatmul.mubr.f32.gmra.mxu0 %v1489
    %v1628 = vpop.f32.mrf.mxu0
    %v1629 = vadd.f32 0.0, %v1628
    %v1630 = vpop.f32.mrf.mxu0
    %v1631 = vadd.f32 0.0, %v1630
    %1632 = vdwg.mxu0
    %v1637 = vrot.slane %v1558, 1
    %v1638 = vrot.slane %v1560, 1
    %v1639 = vrot.slane %v1629, 1
    %v1640 = vrot.slane %v1631, 1
    %v1645 = vadd.f32 %v181, %v1637
    %v1646 = vadd.f32 %v183, %v1638
    %v1647 = vadd.f32 %v252, %v1639
    %v1648 = vadd.f32 %v254, %v1640
    %v1649 = vtanh.pop %v1645
    %v1650 = vtanh.pop %v1646
    %v1651 = vtanh.pop %v1647
    %v1652 = vtanh.pop %v1648
    %v1653 = vmul.f32 %v1649, 0.5
    %v1654 = vadd.f32 %v1653, 0.5
    %v1655 = vmul.f32 %v1650, 0.5
    %v1656 = vadd.f32 %v1655, 0.5
    %v1657 = vmul.f32 %v1652, 0.5
    %v1658 = vadd.f32 %v1657, 0.5
    %v1660 = vrot.slane %v1485, 7
    %v1662 = vmul.f32 %v1656, %v1660
    %v1663 = vmul.f32 %v1654, %v1651
    %v1664 = vadd.f32 %v1662, %v1663
    %v1665 = vtanh.pop %v1664
    %v1666 = vmul.f32 %v1658, %v1665
    %v1667 = vmax.f32 %v1666, 0.0
    %v1668 = vld [vmem:[#allocation2 + $0x20] sm:$0xff]
    %v1669 = vld [vmem:[#allocation2 + $0x48] sm:$0xff]
    %v1670 = vld [vmem:[#allocation2 + $0x70] sm:$0xff]
    %v1671 = vld [vmem:[#allocation2 + $0x98] sm:$0xff]
    %v1672 = vld [vmem:[#allocation2 + $0xc0] sm:$0xff]
    %v1673 = vld [vmem:[#allocation2 + $0xe8] sm:$0xff]
    %v1674 = vld [vmem:[#allocation2 + $0x110] sm:$0xff]
    %v1675 = vld [vmem:[#allocation2 + $0x138] sm:$0xff]
    %v1676 = vld [vmem:[#allocation2 + $0x160] sm:$0xff]
    %v1677 = vld [vmem:[#allocation2 + $0x188] sm:$0xff]
    %v1678 = vld [vmem:[#allocation2 + $0x1b0] sm:$0xff]
    %v1679 = vld [vmem:[#allocation2 + $0x1d8] sm:$0xff]
    %v1680 = vld [vmem:[#allocation2 + $0x200] sm:$0xff]
    %v1681 = vld [vmem:[#allocation2 + $0x228] sm:$0xff]
    %v1682 = vld [vmem:[#allocation2 + $0x250] sm:$0xff]
    %v1683 = vld [vmem:[#allocation2 + $0x278] sm:$0xff]
    %v1684 = vld [vmem:[#allocation2 + $0x2a2] ss:$0 sm:$0xff]
    %v1686 = vrot.slane %v1667, 7
    %1688 = vmatprep.subr.mxu0 0.0
    %1689 = vmatpush1.msra.mxu0 %v1683
    %1690 = vmatprep.subr.mxu0 0.0
    %1691 = vmatpush1.msra.mxu0 %v1682
    %1692 = vmatprep.subr.mxu0 0.0
    %1693 = vmatpush1.msra.mxu0 %v1681
    %1694 = vmatprep.subr.mxu0 0.0
    %1695 = vmatpush1.msra.mxu0 %v1680
    %1696 = vmatprep.subr.mxu0 0.0
    %1697 = vmatpush1.msra.mxu0 %v1679
    %1698 = vmatprep.subr.mxu0 0.0
    %1699 = vmatpush1.msra.mxu0 %v1678
    %1700 = vmatprep.subr.mxu0 0.0
    %1701 = vmatpush1.msra.mxu0 %v1677
    %1702 = vmatprep.subr.mxu0 0.0
    %1703 = vmatpush1.msra.mxu0 %v1676
    %1704 = vmatprep.subr.mxu0 0.0
    %1705 = vmatpush1.msra.mxu0 %v1675
    %1706 = vmatprep.subr.mxu0 0.0
    %1707 = vmatpush1.msra.mxu0 %v1674
    %1708 = vmatprep.subr.mxu0 0.0
    %1709 = vmatpush1.msra.mxu0 %v1673
    %1710 = vmatprep.subr.mxu0 0.0
    %1711 = vmatpush1.msra.mxu0 %v1672
    %1712 = vmatprep.subr.mxu0 0.0
    %1713 = vmatpush1.msra.mxu0 %v1671
    %1714 = vmatprep.subr.mxu0 0.0
    %1715 = vmatpush1.msra.mxu0 %v1670
    %1716 = vmatprep.subr.mxu0 0.0
    %1717 = vmatpush1.msra.mxu0 %v1669
    %1718 = vmatprep.subr.mxu0 0.0
    %1719 = vmatpush1.msra.mxu0 %v1668
    %1720 = vmatprep.subr.mxu0 0.0
    %1721 = vmatpush2.msra.mxu0 0.0
    %1722 = vmatprep.subr.mxu0 0.0
    %1723 = vmatpush2.msra.mxu0 0.0
    %1724 = vmatprep.subr.mxu0 0.0
    %1725 = vmatpush2.msra.mxu0 0.0
    %1726 = vmatprep.subr.mxu0 0.0
    %1727 = vmatpush2.msra.mxu0 0.0
    %1728 = vmatprep.subr.mxu0 0.0
    %1729 = vmatpush2.msra.mxu0 0.0
    %1730 = vmatprep.subr.mxu0 0.0
    %1731 = vmatpush2.msra.mxu0 0.0
    %1732 = vmatprep.subr.mxu0 0.0
    %1733 = vmatpush2.msra.mxu0 0.0
    %1734 = vmatprep.subr.mxu0 0.0
    %1735 = vmatpush2.msra.mxu0 0.0
    %1736 = vmatprep.subr.mxu0 0.0
    %1737 = vmatpush2.msra.mxu0 0.0
    %1738 = vmatprep.subr.mxu0 0.0
    %1739 = vmatpush2.msra.mxu0 0.0
    %1740 = vmatprep.subr.mxu0 0.0
    %1741 = vmatpush2.msra.mxu0 0.0
    %1742 = vmatprep.subr.mxu0 0.0
    %1743 = vmatpush2.msra.mxu0 0.0
    %1744 = vmatprep.subr.mxu0 0.0
    %1745 = vmatpush2.msra.mxu0 0.0
    %1746 = vmatprep.subr.mxu0 0.0
    %1747 = vmatpush2.msra.mxu0 0.0
    %1748 = vmatprep.subr.mxu0 0.0
    %1749 = vmatpush2.msra.mxu0 0.0
    %1750 = vmatprep.subr.mxu0 0.0
    %1751 = vmatpush2.msra.mxu0 0.0
    %1752 = vmatprep.mubr.f32.mxu0 0.0
    %1753 = vmatmul.mubr.f32.gmra.mxu0 %v1686
    %v1754 = vpop.f32.mrf.mxu0
    %v1755 = vadd.f32 %v1684, %v1754
    %v1756 = vpop.f32.mrf.mxu0
    %1757 = vdwg.mxu0
    %v1758 = vmax.f32 %v1755, 0.0
    %v1759 = vld [vmem:[#allocation2] sm:$0xff]
    %v1760 = vld [vmem:[#allocation2 + $0x28] sm:$0xff]
    %v1761 = vld [vmem:[#allocation2 + $0x50] sm:$0xff]
    %v1762 = vld [vmem:[#allocation2 + $0x78] sm:$0xff]
    %v1763 = vld [vmem:[#allocation2 + $0xa0] sm:$0xff]
    %v1764 = vld [vmem:[#allocation2 + $0xc8] sm:$0xff]
    %v1765 = vld [vmem:[#allocation2 + $0xf0] sm:$0xff]
    %v1766 = vld [vmem:[#allocation2 + $0x118] sm:$0xff]
    %v1767 = vld [vmem:[#allocation2 + $0x140] sm:$0xff]
    %v1768 = vld [vmem:[#allocation2 + $0x168] sm:$0xff]
    %v1769 = vld [vmem:[#allocation2 + $0x190] sm:$0xff]
    %v1770 = vld [vmem:[#allocation2 + $0x1b8] sm:$0xff]
    %v1771 = vld [vmem:[#allocation2 + $0x1e0] sm:$0xff]
    %v1772 = vld [vmem:[#allocation2 + $0x208] sm:$0xff]
    %v1773 = vld [vmem:[#allocation2 + $0x230] sm:$0xff]
    %v1774 = vld [vmem:[#allocation2 + $0x258] sm:$0xff]
    %v1775 = vld [vmem:[#allocation2 + $0x282] ss:$0 sm:$0xff]
    %1776 = vmatprep.subr.mxu0 0.0
    %1777 = vmatpush1.msra.mxu0 %v1774
    %1778 = vmatprep.subr.mxu0 0.0
    %1779 = vmatpush1.msra.mxu0 %v1773
    %1780 = vmatprep.subr.mxu0 0.0
    %1781 = vmatpush1.msra.mxu0 %v1772
    %1782 = vmatprep.subr.mxu0 0.0
    %1783 = vmatpush1.msra.mxu0 %v1771
    %1784 = vmatprep.subr.mxu0 0.0
    %1785 = vmatpush1.msra.mxu0 %v1770
    %1786 = vmatprep.subr.mxu0 0.0
    %1787 = vmatpush1.msra.mxu0 %v1769
    %1788 = vmatprep.subr.mxu0 0.0
    %1789 = vmatpush1.msra.mxu0 %v1768
    %1790 = vmatprep.subr.mxu0 0.0
    %1791 = vmatpush1.msra.mxu0 %v1767
    %1792 = vmatprep.subr.mxu0 0.0
    %1793 = vmatpush1.msra.mxu0 %v1766
    %1794 = vmatprep.subr.mxu0 0.0
    %1795 = vmatpush1.msra.mxu0 %v1765
    %1796 = vmatprep.subr.mxu0 0.0
    %1797 = vmatpush1.msra.mxu0 %v1764
    %1798 = vmatprep.subr.mxu0 0.0
    %1799 = vmatpush1.msra.mxu0 %v1763
    %1800 = vmatprep.subr.mxu0 0.0
    %1801 = vmatpush1.msra.mxu0 %v1762
    %1802 = vmatprep.subr.mxu0 0.0
    %1803 = vmatpush1.msra.mxu0 %v1761
    %1804 = vmatprep.subr.mxu0 0.0
    %1805 = vmatpush1.msra.mxu0 %v1760
    %1806 = vmatprep.subr.mxu0 0.0
    %1807 = vmatpush1.msra.mxu0 %v1759
    %1808 = vmatprep.subr.mxu0 0.0
    %1809 = vmatpush2.msra.mxu0 0.0
    %1810 = vmatprep.subr.mxu0 0.0
    %1811 = vmatpush2.msra.mxu0 0.0
    %1812 = vmatprep.subr.mxu0 0.0
    %1813 = vmatpush2.msra.mxu0 0.0
    %1814 = vmatprep.subr.mxu0 0.0
    %1815 = vmatpush2.msra.mxu0 0.0
    %1816 = vmatprep.subr.mxu0 0.0
    %1817 = vmatpush2.msra.mxu0 0.0
    %1818 = vmatprep.subr.mxu0 0.0
    %1819 = vmatpush2.msra.mxu0 0.0
    %1820 = vmatprep.subr.mxu0 0.0
    %1821 = vmatpush2.msra.mxu0 0.0
    %1822 = vmatprep.subr.mxu0 0.0
    %1823 = vmatpush2.msra.mxu0 0.0
    %1824 = vmatprep.subr.mxu0 0.0
    %1825 = vmatpush2.msra.mxu0 0.0
    %1826 = vmatprep.subr.mxu0 0.0
    %1827 = vmatpush2.msra.mxu0 0.0
    %1828 = vmatprep.subr.mxu0 0.0
    %1829 = vmatpush2.msra.mxu0 0.0
    %1830 = vmatprep.subr.mxu0 0.0
    %1831 = vmatpush2.msra.mxu0 0.0
    %1832 = vmatprep.subr.mxu0 0.0
    %1833 = vmatpush2.msra.mxu0 0.0
    %1834 = vmatprep.subr.mxu0 0.0
    %1835 = vmatpush2.msra.mxu0 0.0
    %1836 = vmatprep.subr.mxu0 0.0
    %1837 = vmatpush2.msra.mxu0 0.0
    %1838 = vmatprep.subr.mxu0 0.0
    %1839 = vmatpush2.msra.mxu0 0.0
    %1840 = vmatprep.mubr.f32.mxu0 0.0
    %1841 = vmatmul.mubr.f32.gmra.mxu0 %v1758
    %v1842 = vpop.f32.mrf.mxu0
    %v1843 = vadd.f32 %v1775, %v1842
    %v1844 = vpop.f32.mrf.mxu0
    %1845 = vdwg.mxu0
    %v1846 = vmax.f32 %v1843, 0.0
    %v1847 = vld [vmem:[#allocation2 + $0x8] sm:$0xff]
    %v1848 = vld [vmem:[#allocation2 + $0x30] sm:$0xff]
    %v1849 = vld [vmem:[#allocation2 + $0x58] sm:$0xff]
    %v1850 = vld [vmem:[#allocation2 + $0x80] sm:$0xff]
    %v1851 = vld [vmem:[#allocation2 + $0xa8] sm:$0xff]
    %v1852 = vld [vmem:[#allocation2 + $0xd0] sm:$0xff]
    %v1853 = vld [vmem:[#allocation2 + $0xf8] sm:$0xff]
    %v1854 = vld [vmem:[#allocation2 + $0x120] sm:$0xff]
    %v1855 = vld [vmem:[#allocation2 + $0x148] sm:$0xff]
    %v1856 = vld [vmem:[#allocation2 + $0x170] sm:$0xff]
    %v1857 = vld [vmem:[#allocation2 + $0x198] sm:$0xff]
    %v1858 = vld [vmem:[#allocation2 + $0x1c0] sm:$0xff]
    %v1859 = vld [vmem:[#allocation2 + $0x1e8] sm:$0xff]
    %v1860 = vld [vmem:[#allocation2 + $0x210] sm:$0xff]
    %v1861 = vld [vmem:[#allocation2 + $0x238] sm:$0xff]
    %v1862 = vld [vmem:[#allocation2 + $0x260] sm:$0xff]
    %v1863 = vld [vmem:[#allocation2 + $0x28a] ss:$0 sm:$0xff]
    %1864 = vmatprep.subr.mxu0 0.0
    %1865 = vmatpush1.msra.mxu0 %v1862
    %1866 = vmatprep.subr.mxu0 0.0
    %1867 = vmatpush1.msra.mxu0 %v1861
    %1868 = vmatprep.subr.mxu0 0.0
    %1869 = vmatpush1.msra.mxu0 %v1860
    %1870 = vmatprep.subr.mxu0 0.0
    %1871 = vmatpush1.msra.mxu0 %v1859
    %1872 = vmatprep.subr.mxu0 0.0
    %1873 = vmatpush1.msra.mxu0 %v1858
    %1874 = vmatprep.subr.mxu0 0.0
    %1875 = vmatpush1.msra.mxu0 %v1857
    %1876 = vmatprep.subr.mxu0 0.0
    %1877 = vmatpush1.msra.mxu0 %v1856
    %1878 = vmatprep.subr.mxu0 0.0
    %1879 = vmatpush1.msra.mxu0 %v1855
    %1880 = vmatprep.subr.mxu0 0.0
    %1881 = vmatpush1.msra.mxu0 %v1854
    %1882 = vmatprep.subr.mxu0 0.0
    %1883 = vmatpush1.msra.mxu0 %v1853
    %1884 = vmatprep.subr.mxu0 0.0
    %1885 = vmatpush1.msra.mxu0 %v1852
    %1886 = vmatprep.subr.mxu0 0.0
    %1887 = vmatpush1.msra.mxu0 %v1851
    %1888 = vmatprep.subr.mxu0 0.0
    %1889 = vmatpush1.msra.mxu0 %v1850
    %1890 = vmatprep.subr.mxu0 0.0
    %1891 = vmatpush1.msra.mxu0 %v1849
    %1892 = vmatprep.subr.mxu0 0.0
    %1893 = vmatpush1.msra.mxu0 %v1848
    %1894 = vmatprep.subr.mxu0 0.0
    %1895 = vmatpush1.msra.mxu0 %v1847
    %1896 = vmatprep.subr.mxu0 0.0
    %1897 = vmatpush2.msra.mxu0 0.0
    %1898 = vmatprep.subr.mxu0 0.0
    %1899 = vmatpush2.msra.mxu0 0.0
    %1900 = vmatprep.subr.mxu0 0.0
    %1901 = vmatpush2.msra.mxu0 0.0
    %1902 = vmatprep.subr.mxu0 0.0
    %1903 = vmatpush2.msra.mxu0 0.0
    %1904 = vmatprep.subr.mxu0 0.0
    %1905 = vmatpush2.msra.mxu0 0.0
    %1906 = vmatprep.subr.mxu0 0.0
    %1907 = vmatpush2.msra.mxu0 0.0
    %1908 = vmatprep.subr.mxu0 0.0
    %1909 = vmatpush2.msra.mxu0 0.0
    %1910 = vmatprep.subr.mxu0 0.0
    %1911 = vmatpush2.msra.mxu0 0.0
    %1912 = vmatprep.subr.mxu0 0.0
    %1913 = vmatpush2.msra.mxu0 0.0
    %1914 = vmatprep.subr.mxu0 0.0
    %1915 = vmatpush2.msra.mxu0 0.0
    %1916 = vmatprep.subr.mxu0 0.0
    %1917 = vmatpush2.msra.mxu0 0.0
    %1918 = vmatprep.subr.mxu0 0.0
    %1919 = vmatpush2.msra.mxu0 0.0
    %1920 = vmatprep.subr.mxu0 0.0
    %1921 = vmatpush2.msra.mxu0 0.0
    %1922 = vmatprep.subr.mxu0 0.0
    %1923 = vmatpush2.msra.mxu0 0.0
    %1924 = vmatprep.subr.mxu0 0.0
    %1925 = vmatpush2.msra.mxu0 0.0
    %1926 = vmatprep.subr.mxu0 0.0
    %1927 = vmatpush2.msra.mxu0 0.0
    %1928 = vmatprep.mubr.f32.mxu0 0.0
    %1929 = vmatmul.mubr.f32.gmra.mxu0 %v1846
    %v1930 = vpop.f32.mrf.mxu0
    %v1931 = vadd.f32 %v1863, %v1930
    %v1932 = vpop.f32.mrf.mxu0
    %1933 = vdwg.mxu0
    %v1934 = vmax.f32 %v1931, 0.0
    %v1935 = vld [vmem:[#allocation2 + $0x10] sm:$0xff]
    %v1936 = vld [vmem:[#allocation2 + $0x38] sm:$0xff]
    %v1937 = vld [vmem:[#allocation2 + $0x60] sm:$0xff]
    %v1938 = vld [vmem:[#allocation2 + $0x88] sm:$0xff]
    %v1939 = vld [vmem:[#allocation2 + $0xb0] sm:$0xff]
    %v1940 = vld [vmem:[#allocation2 + $0xd8] sm:$0xff]
    %v1941 = vld [vmem:[#allocation2 + $0x100] sm:$0xff]
    %v1942 = vld [vmem:[#allocation2 + $0x128] sm:$0xff]
    %v1943 = vld [vmem:[#allocation2 + $0x150] sm:$0xff]
    %v1944 = vld [vmem:[#allocation2 + $0x178] sm:$0xff]
    %v1945 = vld [vmem:[#allocation2 + $0x1a0] sm:$0xff]
    %v1946 = vld [vmem:[#allocation2 + $0x1c8] sm:$0xff]
    %v1947 = vld [vmem:[#allocation2 + $0x1f0] sm:$0xff]
    %v1948 = vld [vmem:[#allocation2 + $0x218] sm:$0xff]
    %v1949 = vld [vmem:[#allocation2 + $0x240] sm:$0xff]
    %v1950 = vld [vmem:[#allocation2 + $0x268] sm:$0xff]
    %v1951 = vld [vmem:[#allocation2 + $0x292] ss:$0 sm:$0xff]
    %1952 = vmatprep.subr.mxu0 0.0
    %1953 = vmatpush1.msra.mxu0 %v1950
    %1954 = vmatprep.subr.mxu0 0.0
    %1955 = vmatpush1.msra.mxu0 %v1949
    %1956 = vmatprep.subr.mxu0 0.0
    %1957 = vmatpush1.msra.mxu0 %v1948
    %1958 = vmatprep.subr.mxu0 0.0
    %1959 = vmatpush1.msra.mxu0 %v1947
    %1960 = vmatprep.subr.mxu0 0.0
    %1961 = vmatpush1.msra.mxu0 %v1946
    %1962 = vmatprep.subr.mxu0 0.0
    %1963 = vmatpush1.msra.mxu0 %v1945
    %1964 = vmatprep.subr.mxu0 0.0
    %1965 = vmatpush1.msra.mxu0 %v1944
    %1966 = vmatprep.subr.mxu0 0.0
    %1967 = vmatpush1.msra.mxu0 %v1943
    %1968 = vmatprep.subr.mxu0 0.0
    %1969 = vmatpush1.msra.mxu0 %v1942
    %1970 = vmatprep.subr.mxu0 0.0
    %1971 = vmatpush1.msra.mxu0 %v1941
    %1972 = vmatprep.subr.mxu0 0.0
    %1973 = vmatpush1.msra.mxu0 %v1940
    %1974 = vmatprep.subr.mxu0 0.0
    %1975 = vmatpush1.msra.mxu0 %v1939
    %1976 = vmatprep.subr.mxu0 0.0
    %1977 = vmatpush1.msra.mxu0 %v1938
    %1978 = vmatprep.subr.mxu0 0.0
    %1979 = vmatpush1.msra.mxu0 %v1937
    %1980 = vmatprep.subr.mxu0 0.0
    %1981 = vmatpush1.msra.mxu0 %v1936
    %1982 = vmatprep.subr.mxu0 0.0
    %1983 = vmatpush1.msra.mxu0 %v1935
    %1984 = vmatprep.subr.mxu0 0.0
    %1985 = vmatpush2.msra.mxu0 0.0
    %1986 = vmatprep.subr.mxu0 0.0
    %1987 = vmatpush2.msra.mxu0 0.0
    %1988 = vmatprep.subr.mxu0 0.0
    %1989 = vmatpush2.msra.mxu0 0.0
    %1990 = vmatprep.subr.mxu0 0.0
    %1991 = vmatpush2.msra.mxu0 0.0
    %1992 = vmatprep.subr.mxu0 0.0
    %1993 = vmatpush2.msra.mxu0 0.0
    %1994 = vmatprep.subr.mxu0 0.0
    %1995 = vmatpush2.msra.mxu0 0.0
    %1996 = vmatprep.subr.mxu0 0.0
    %1997 = vmatpush2.msra.mxu0 0.0
    %1998 = vmatprep.subr.mxu0 0.0
    %1999 = vmatpush2.msra.mxu0 0.0
    %2000 = vmatprep.subr.mxu0 0.0
    %2001 = vmatpush2.msra.mxu0 0.0
    %2002 = vmatprep.subr.mxu0 0.0
    %2003 = vmatpush2.msra.mxu0 0.0
    %2004 = vmatprep.subr.mxu0 0.0
    %2005 = vmatpush2.msra.mxu0 0.0
    %2006 = vmatprep.subr.mxu0 0.0
    %2007 = vmatpush2.msra.mxu0 0.0
    %2008 = vmatprep.subr.mxu0 0.0
    %2009 = vmatpush2.msra.mxu0 0.0
    %2010 = vmatprep.subr.mxu0 0.0
    %2011 = vmatpush2.msra.mxu0 0.0
    %2012 = vmatprep.subr.mxu0 0.0
    %2013 = vmatpush2.msra.mxu0 0.0
    %2014 = vmatprep.subr.mxu0 0.0
    %2015 = vmatpush2.msra.mxu0 0.0
    %2016 = vmatprep.mubr.f32.mxu0 0.0
    %2017 = vmatmul.mubr.f32.gmra.mxu0 %v1934
    %v2018 = vpop.f32.mrf.mxu0
    %v2019 = vadd.f32 %v1951, %v2018
    %v2020 = vpop.f32.mrf.mxu0
    %2021 = vdwg.mxu0
    %v2022 = vmax.f32 %v2019, 0.0
    %2023 = vst [vmem:[%s2] sm:$0x1] %v2022
    // Predicated region
    $region14: #{seq_regressor_forward.1} parent=1 // pred_check
      _
    $region15: #{seq_regressor_forward.1} parent=1 // pred_check_branch
      %2025 = sbr.rel (0) target = $region17
    $region16: #{seq_regressor_forward.1} parent=1 // pred_region
      _
    $region17: #{seq_regressor_forward.1} parent=1 // pred_fallthru
      _
    // Predicated region
    $region18: #{seq_regressor_forward.1} parent=1 // pred_check
      _
    $region19: #{seq_regressor_forward.1} parent=1 // pred_check_branch
      %2027 = sbr.rel (0) target = $region21
    $region20: #{seq_regressor_forward.1} parent=1 // pred_region
      _
    $region21: #{seq_regressor_forward.1} parent=1 // pred_fallthru
      _
    %2028 = vsyncpa [#allocation3], 1

</llo_original>
